<compile_context>
chip_gen: v6e
topology: v6e:2x2x1
jax: 0.10.0
libtpu: 0.0.40
codegen_flags: <defaults>
</compile_context>

<pallas_src>
import jax
import jax.numpy as jnp
from jax.experimental import pallas as pl
from jax.experimental.pallas import tpu as pltpu

_LANE = 128


def _round_up(x, m):
    return (x + m - 1) // m * m


def _pad2(a, rows, cols):
    pr, pc = rows - a.shape[0], cols - a.shape[1]
    if pr or pc:
        a = jnp.pad(a, ((0, pr), (0, pc)))
    return a


def fc1_kernel(x_ref, w1_ref, b1_ref, w2_ref, b2_ref, o_ref):
    # Both matmuls on the MXU (f32 accumulation); bias adds + ReLU on the VPU,
    # all fused in VMEM.
    x = x_ref[...]
    h = jnp.dot(x, w1_ref[...], preferred_element_type=jnp.float32)
    h = h + b1_ref[...]              # b1 is (1, hidden_p) f32 -> broadcasts
    h = jnp.maximum(h, 0.0)          # ReLU in f32
    h = h.astype(w2_ref.dtype)       # feed bf16/f32 into the second MXU pass
    o = jnp.dot(h, w2_ref[...], preferred_element_type=jnp.float32)
    o = o + b2_ref[...]              # b2 is (1, out_p) f32
    o_ref[...] = o.astype(o_ref.dtype)


def _fc1_pallas_call(x, w1, b1, w2, b2, *, batch_tile, out_dtype,
                     single_buffer_weights):
    B_p, in_p = x.shape
    hid_p = w1.shape[1]
    out_p = w2.shape[1]
    n_tiles = B_p // batch_tile

    c_itemsize = jnp.dtype(x.dtype).itemsize
    o_itemsize = jnp.dtype(out_dtype).itemsize

    # Constant-index (resident) blocks: single-buffer them if supported.
    w_kwargs = ({"pipeline_mode": pl.Buffered(1)}
                if single_buffer_weights else {})
    w_bufs = 1 if single_buffer_weights else 2

    # Explicit VMEM budget: double-buffered x/out tiles, (single-)buffered
    # weights/biases, f32 intermediates, plus generous compiler headroom.
    vmem_bytes = (2 * batch_tile * in_p * c_itemsize
                  + 2 * batch_tile * out_p * o_itemsize
                  + w_bufs * (in_p * hid_p + hid_p * out_p) * c_itemsize
                  + w_bufs * (hid_p + out_p) * 4
                  + batch_tile * (hid_p + out_p) * 4)
    vmem_limit = int(min(2 * vmem_bytes + (16 << 20), 64 << 20))

    flops = 2 * B_p * (in_p * hid_p + hid_p * out_p)
    bytes_accessed = (B_p * (in_p * c_itemsize + out_p * o_itemsize)
                      + (in_p * hid_p + hid_p * out_p) * c_itemsize
                      + (hid_p + out_p) * 4)

    return pl.pallas_call(
        fc1_kernel,
        out_shape=jax.ShapeDtypeStruct((B_p, out_p), out_dtype),
        grid_spec=pltpu.PrefetchScalarGridSpec(
            num_scalar_prefetch=0,
            grid=(n_tiles,),
            in_specs=[
                pl.BlockSpec((batch_tile, in_p), lambda i: (i, 0)),       # x tile
                pl.BlockSpec((in_p, hid_p), lambda i: (0, 0), **w_kwargs),  # w1
                pl.BlockSpec((1, hid_p), lambda i: (0, 0), **w_kwargs),     # b1
                pl.BlockSpec((hid_p, out_p), lambda i: (0, 0), **w_kwargs), # w2
                pl.BlockSpec((1, out_p), lambda i: (0, 0), **w_kwargs),     # b2
            ],
            out_specs=pl.BlockSpec((batch_tile, out_p), lambda i: (i, 0)),
        ),
        compiler_params=pltpu.CompilerParams(
            dimension_semantics=("parallel",),       # megacore-shardable
            vmem_limit_bytes=vmem_limit,
        ),
        cost_estimate=pl.CostEstimate(
            flops=flops, transcendentals=0, bytes_accessed=bytes_accessed),
    )(x, w1, b1, w2, b2)


def fc1_forward(x, w1, b1, w2, b2, *, batch_tile=None, compute_dtype=None):
    """x: [B, in_feat]; w1: [in_feat, H]; b1: [1, H]; w2: [H, O]; b2: [1, O].

    compute_dtype: optional (e.g. jnp.bfloat16) dtype for x/w1/w2 on the MXU;
    accumulation, bias adds and ReLU stay in f32. Output dtype == x.dtype.
    """
    out_dtype = x.dtype
    B, in_feat = x.shape
    hidden = w1.shape[1]
    out_feat = w2.shape[1]

    c_dtype = jnp.dtype(compute_dtype) if compute_dtype is not None else jnp.dtype(out_dtype)
    # Sublane multiple for the batch tile: 8 (f32), 16 (bf16), 32 (8-bit).
    sub = 8 * max(1, 4 // c_dtype.itemsize)

    if batch_tile is None:
        batch_tile = 512 if c_dtype.itemsize == 2 else 256
    batch_tile = min(batch_tile, _round_up(B, sub))
    batch_tile = max(sub, _round_up(batch_tile, sub))

    # Pad everything to lane-dense / tile-aligned shapes (zeros are exact
    # no-ops through matmul + ReLU, and padded output columns/rows are
    # stripped below).
    B_p = _round_up(B, batch_tile)
    in_p = _round_up(in_feat, _LANE)
    hid_p = _round_up(hidden, _LANE)
    out_p = _round_up(out_feat, _LANE)

    xp = _pad2(x.astype(c_dtype), B_p, in_p)
    w1p = _pad2(w1.astype(c_dtype), in_p, hid_p)
    w2p = _pad2(w2.astype(c_dtype), hid_p, out_p)
    b1p = _pad2(b1.reshape(1, -1).astype(jnp.float32), 1, hid_p)
    b2p = _pad2(b2.reshape(1, -1).astype(jnp.float32), 1, out_p)

    try:
        out = _fc1_pallas_call(xp, w1p, b1p, w2p, b2p,
                               batch_tile=batch_tile, out_dtype=out_dtype,
                               single_buffer_weights=True)
    except Exception:
        # pl.Buffered(1) (single-buffered resident weights) not supported on
        # this JAX version -> fall back to default double buffering.
        out = _fc1_pallas_call(xp, w1p, b1p, w2p, b2p,
                               batch_tile=batch_tile, out_dtype=out_dtype,
                               single_buffer_weights=False)
    return out[:B, :out_feat]


def init_fc1_params(key, in_feat, hidden_feat, out_feat, bias1=True, bias2=True,
                    dtype=jnp.float32):
    """Deterministic nn.Linear-style (uniform +/- 1/sqrt(fan_in)) init."""
    k1, k2, k3, k4 = jax.random.split(key, 4)
    bound1 = 1.0 / jnp.sqrt(in_feat)
    bound2 = 1.0 / jnp.sqrt(hidden_feat)
    # Stored already transposed: [in, out] so the kernel does x @ w directly.
    w1 = jax.random.uniform(k1, (in_feat, hidden_feat), dtype, -bound1, bound1)
    w2 = jax.random.uniform(k2, (hidden_feat, out_feat), dtype, -bound2, bound2)
    b1 = (jax.random.uniform(k3, (1, hidden_feat), dtype, -bound1, bound1)
          if bias1 else jnp.zeros((1, hidden_feat), dtype))
    b2 = (jax.random.uniform(k4, (1, out_feat), dtype, -bound2, bound2)
          if bias2 else jnp.zeros((1, out_feat), dtype))
    return w1, b1, w2, b2


def fc1_reference(x, w1, b1, w2, b2):
    h = jnp.maximum(x @ w1 + b1, 0.0)
    return h @ w2 + b2


if __name__ == "__main__":
    in_feat, hidden_feat, out_feat = 256, 128, 32
    bias1, bias2 = True, True

    key = jax.random.PRNGKey(0)
    kx, kp = jax.random.split(key)
    w1, b1, w2, b2 = init_fc1_params(kp, in_feat, hidden_feat, out_feat,
                                     bias1, bias2)

    # Case 1: batch large enough to exercise batch tiling (2 grid steps ->
    # pipelining / v7x megacore sharding) and the lane-dense padded output.
    B = 512
    x = jax.random.normal(kx, (B, in_feat), dtype=jnp.float32)
    out = jax.block_until_ready(fc1_forward(x, w1, b1, w2, b2, batch_tile=256))
    ref = fc1_reference(x, w1, b1, w2, b2)
    assert out.shape == (B, out_feat)
    assert jnp.allclose(out, ref, atol=1e-4, rtol=1e-4), "f32 tiled mismatch"

    # Case 2: small batch (exercises tile clamping / batch padding path).
    Bs = 8
    xs = jax.random.normal(jax.random.PRNGKey(1), (Bs, in_feat), dtype=jnp.float32)
    outs = jax.block_until_ready(fc1_forward(xs, w1, b1, w2, b2))
    refs = fc1_reference(xs, w1, b1, w2, b2)
    assert outs.shape == (Bs, out_feat)
    assert jnp.allclose(outs, refs, atol=1e-4, rtol=1e-4), "small-batch mismatch"

    # Case 3: bf16 compute path (MXU-rated dtype on v6e/v7x), f32 accumulation.
    outb = jax.block_until_ready(
        fc1_forward(x, w1, b1, w2, b2, batch_tile=256,
                    compute_dtype=jnp.bfloat16))
    assert outb.shape == (B, out_feat)
    assert jnp.allclose(outb.astype(jnp.float32), ref, atol=5e-2, rtol=5e-2), \
        "bf16 path mismatch"

    print("KERNEL_OK")
</pallas_src>

<mosaic_0001>
module attributes {stable_mosaic.version = 11 : i64} {
  func.func @fc1_kernel(%arg0: i32, %arg1: memref<256x256xf32, #tpu.memory_space<vmem>>, %arg2: memref<256x128xf32, #tpu.memory_space<vmem>>, %arg3: memref<1x128xf32, #tpu.memory_space<vmem>>, %arg4: memref<128x128xf32, #tpu.memory_space<vmem>>, %arg5: memref<1x128xf32, #tpu.memory_space<vmem>>, %arg6: memref<256x128xf32, #tpu.memory_space<vmem>>) attributes {dimension_semantics = [#tpu.dimension_semantics<parallel>], iteration_bounds = array<i64: 2>, scalar_prefetch = 0 : i64, scratch_operands = 0 : i64, tpu.core_type = #tpu.core_type<tc>, window_params = [{transform_indices = @transform_0, window_bounds = array<i64: 256, 256>}, {pipeline_mode = #tpu.pipeline_mode<synchronous>, transform_indices = @transform_1, window_bounds = array<i64: 256, 128>}, {pipeline_mode = #tpu.pipeline_mode<synchronous>, transform_indices = @transform_2, window_bounds = array<i64: 1, 128>}, {pipeline_mode = #tpu.pipeline_mode<synchronous>, transform_indices = @transform_3, window_bounds = array<i64: 128, 128>}, {pipeline_mode = #tpu.pipeline_mode<synchronous>, transform_indices = @transform_4, window_bounds = array<i64: 1, 128>}, {transform_indices = @transform_5, window_bounds = array<i64: 256, 128>}]} {
    %c0 = arith.constant 0 : index
    %c0_0 = arith.constant 0 : index
    %0 = vector.load %arg1[%c0, %c0_0] : memref<256x256xf32, #tpu.memory_space<vmem>>, vector<256x256xf32>
    %c0_1 = arith.constant 0 : index
    %c0_2 = arith.constant 0 : index
    %1 = vector.load %arg2[%c0_1, %c0_2] : memref<256x128xf32, #tpu.memory_space<vmem>>, vector<256x128xf32>
    %cst = arith.constant dense<0.000000e+00> : vector<256x128xf32>
    %2 = tpu.matmul %0, %1, %cst {dimension_numbers = #tpu.dot_dimension_numbers<[1], [0], [0], [1], [0, 0, 1, 1], [], []>} : vector<256x256xf32>, vector<256x128xf32>, vector<256x128xf32> -> vector<256x128xf32>
    %c0_3 = arith.constant 0 : index
    %c0_4 = arith.constant 0 : index
    %3 = vector.load %arg3[%c0_3, %c0_4] : memref<1x128xf32, #tpu.memory_space<vmem>>, vector<1x128xf32>
    %4 = vector.broadcast %3 : vector<1x128xf32> to vector<256x128xf32>
    %5 = arith.addf %2, %4 : vector<256x128xf32>
    %cst_5 = arith.constant 0.000000e+00 : f32
    %6 = vector.broadcast %cst_5 : f32 to vector<256x128xf32>
    %7 = arith.maximumf %5, %6 : vector<256x128xf32>
    %c0_6 = arith.constant 0 : index
    %c0_7 = arith.constant 0 : index
    %8 = vector.load %arg4[%c0_6, %c0_7] : memref<128x128xf32, #tpu.memory_space<vmem>>, vector<128x128xf32>
    %cst_8 = arith.constant dense<0.000000e+00> : vector<256x128xf32>
    %9 = tpu.matmul %7, %8, %cst_8 {dimension_numbers = #tpu.dot_dimension_numbers<[1], [0], [0], [1], [0, 0, 1, 1], [], []>} : vector<256x128xf32>, vector<128x128xf32>, vector<256x128xf32> -> vector<256x128xf32>
    %c0_9 = arith.constant 0 : index
    %c0_10 = arith.constant 0 : index
    %10 = vector.load %arg5[%c0_9, %c0_10] : memref<1x128xf32, #tpu.memory_space<vmem>>, vector<1x128xf32>
    %11 = vector.broadcast %10 : vector<1x128xf32> to vector<256x128xf32>
    %12 = arith.addf %9, %11 : vector<256x128xf32>
    %c0_11 = arith.constant 0 : index
    %c0_12 = arith.constant 0 : index
    %13 = vector.load %arg6[%c0_11, %c0_12] : memref<256x128xf32, #tpu.memory_space<vmem>>, vector<256x128xf32>
    tpu.vector_store %arg6[%c0_11, %c0_12], %12 {strides = array<i32>} : memref<256x128xf32, #tpu.memory_space<vmem>>, vector<256x128xf32>,
    return
  }
  func.func @transform_0(%arg0: i32) -> (i32, i32) {
    %c0_i32 = arith.constant 0 : i32
    %c0_i32_0 = arith.constant 0 : i32
    return %arg0, %c0_i32 : i32, i32
  }
  func.func @transform_1(%arg0: i32) -> (i32, i32) {
    %c0_i32 = arith.constant 0 : i32
    %c0_i32_0 = arith.constant 0 : i32
    %c0_i32_1 = arith.constant 0 : i32
    return %c0_i32, %c0_i32_0 : i32, i32
  }
  func.func @transform_2(%arg0: i32) -> (i32, i32) {
    %c0_i32 = arith.constant 0 : i32
    %c0_i32_0 = arith.constant 0 : i32
    %c0_i32_1 = arith.constant 0 : i32
    return %c0_i32, %c0_i32_0 : i32, i32
  }
  func.func @transform_3(%arg0: i32) -> (i32, i32) {
    %c0_i32 = arith.constant 0 : i32
    %c0_i32_0 = arith.constant 0 : i32
    %c0_i32_1 = arith.constant 0 : i32
    return %c0_i32, %c0_i32_0 : i32, i32
  }
  func.func @transform_4(%arg0: i32) -> (i32, i32) {
    %c0_i32 = arith.constant 0 : i32
    %c0_i32_0 = arith.constant 0 : i32
    %c0_i32_1 = arith.constant 0 : i32
    return %c0_i32, %c0_i32_0 : i32, i32
  }
  func.func @transform_5(%arg0: i32) -> (i32, i32) {
    %c0_i32 = arith.constant 0 : i32
    %c0_i32_0 = arith.constant 0 : i32
    return %arg0, %c0_i32 : i32, i32
  }
}

module attributes {stable_mosaic.version = 11 : i64} {
  func.func @fc1_kernel(%arg0: i32, %arg1: memref<256x256xf32, #tpu.memory_space<vmem>>, %arg2: memref<256x128xf32, #tpu.memory_space<vmem>>, %arg3: memref<1x128xf32, #tpu.memory_space<vmem>>, %arg4: memref<128x128xf32, #tpu.memory_space<vmem>>, %arg5: memref<1x128xf32, #tpu.memory_space<vmem>>, %arg6: memref<256x128xf32, #tpu.memory_space<vmem>>) attributes {dimension_semantics = [#tpu.dimension_semantics<parallel>], iteration_bounds = array<i64: 2>, scalar_prefetch = 0 : i64, scratch_operands = 0 : i64, tpu.core_type = #tpu.core_type<tc>, window_params = [{transform_indices = @transform_0, window_bounds = array<i64: 256, 256>}, {pipeline_mode = #tpu.pipeline_mode<synchronous>, transform_indices = @transform_1, window_bounds = array<i64: 256, 128>}, {pipeline_mode = #tpu.pipeline_mode<synchronous>, transform_indices = @transform_2, window_bounds = array<i64: 1, 128>}, {pipeline_mode = #tpu.pipeline_mode<synchronous>, transform_indices = @transform_3, window_bounds = array<i64: 128, 128>}, {pipeline_mode = #tpu.pipeline_mode<synchronous>, transform_indices = @transform_4, window_bounds = array<i64: 1, 128>}, {transform_indices = @transform_5, window_bounds = array<i64: 256, 128>}]} {
    %c0 = arith.constant 0 : index
    %c0_0 = arith.constant 0 : index
    %0 = vector.load %arg1[%c0, %c0_0] : memref<256x256xf32, #tpu.memory_space<vmem>>, vector<256x256xf32>
    %c0_1 = arith.constant 0 : index
    %c0_2 = arith.constant 0 : index
    %1 = vector.load %arg2[%c0_1, %c0_2] : memref<256x128xf32, #tpu.memory_space<vmem>>, vector<256x128xf32>
    %cst = arith.constant dense<0.000000e+00> : vector<256x128xf32>
    %2 = tpu.matmul %0, %1, %cst {dimension_numbers = #tpu.dot_dimension_numbers<[1], [0], [0], [1], [0, 0, 1, 1], [], []>} : vector<256x256xf32>, vector<256x128xf32>, vector<256x128xf32> -> vector<256x128xf32>
    %c0_3 = arith.constant 0 : index
    %c0_4 = arith.constant 0 : index
    %3 = vector.load %arg3[%c0_3, %c0_4] : memref<1x128xf32, #tpu.memory_space<vmem>>, vector<1x128xf32>
    %4 = vector.broadcast %3 : vector<1x128xf32> to vector<256x128xf32>
    %5 = arith.addf %2, %4 : vector<256x128xf32>
    %cst_5 = arith.constant 0.000000e+00 : f32
    %6 = vector.broadcast %cst_5 : f32 to vector<256x128xf32>
    %7 = arith.maximumf %5, %6 : vector<256x128xf32>
    %c0_6 = arith.constant 0 : index
    %c0_7 = arith.constant 0 : index
    %8 = vector.load %arg4[%c0_6, %c0_7] : memref<128x128xf32, #tpu.memory_space<vmem>>, vector<128x128xf32>
    %cst_8 = arith.constant dense<0.000000e+00> : vector<256x128xf32>
    %9 = tpu.matmul %7, %8, %cst_8 {dimension_numbers = #tpu.dot_dimension_numbers<[1], [0], [0], [1], [0, 0, 1, 1], [], []>} : vector<256x128xf32>, vector<128x128xf32>, vector<256x128xf32> -> vector<256x128xf32>
    %c0_9 = arith.constant 0 : index
    %c0_10 = arith.constant 0 : index
    %10 = vector.load %arg5[%c0_9, %c0_10] : memref<1x128xf32, #tpu.memory_space<vmem>>, vector<1x128xf32>
    %11 = vector.broadcast %10 : vector<1x128xf32> to vector<256x128xf32>
    %12 = arith.addf %9, %11 : vector<256x128xf32>
    %c0_11 = arith.constant 0 : index
    %c0_12 = arith.constant 0 : index
    %13 = vector.load %arg6[%c0_11, %c0_12] : memref<256x128xf32, #tpu.memory_space<vmem>>, vector<256x128xf32>
    tpu.vector_store %arg6[%c0_11, %c0_12], %12 {strides = array<i32>} : memref<256x128xf32, #tpu.memory_space<vmem>>, vector<256x128xf32>,
    return
  }
  func.func @transform_0(%arg0: i32) -> (i32, i32) {
    %c0_i32 = arith.constant 0 : i32
    %c0_i32_0 = arith.constant 0 : i32
    return %arg0, %c0_i32 : i32, i32
  }
  func.func @transform_1(%arg0: i32) -> (i32, i32) {
    %c0_i32 = arith.constant 0 : i32
    %c0_i32_0 = arith.constant 0 : i32
    %c0_i32_1 = arith.constant 0 : i32
    return %c0_i32, %c0_i32_0 : i32, i32
  }
  func.func @transform_2(%arg0: i32) -> (i32, i32) {
    %c0_i32 = arith.constant 0 : i32
    %c0_i32_0 = arith.constant 0 : i32
    %c0_i32_1 = arith.constant 0 : i32
    return %c0_i32, %c0_i32_0 : i32, i32
  }
  func.func @transform_3(%arg0: i32) -> (i32, i32) {
    %c0_i32 = arith.constant 0 : i32
    %c0_i32_0 = arith.constant 0 : i32
    %c0_i32_1 = arith.constant 0 : i32
    return %c0_i32, %c0_i32_0 : i32, i32
  }
  func.func @transform_4(%arg0: i32) -> (i32, i32) {
    %c0_i32 = arith.constant 0 : i32
    %c0_i32_0 = arith.constant 0 : i32
    %c0_i32_1 = arith.constant 0 : i32
    return %c0_i32, %c0_i32_0 : i32, i32
  }
  func.func @transform_5(%arg0: i32) -> (i32, i32) {
    %c0_i32 = arith.constant 0 : i32
    %c0_i32_0 = arith.constant 0 : i32
    return %arg0, %c0_i32 : i32, i32
  }
}

</mosaic_0001>

<llo_original>
// kernel: tpu_custom_call.1
$region0: #{tpu_custom_call.1}
  #allocation0 [shape = 'u32[]', space=smem, size = 0x4, offset = 0x4, fixed_abs, tag = 'smem constant byte address 0x4 - core index']
  #allocation1 [shape = 'u32[144,128]{1,0:T(1,128)}', space=vmem, size = 0x12000, scoped, tag = 'internal scratch']
  %s0 = inlined_call_operand.hbm [shape: f32[512,256], index: 0, kind: input, shape index: {}]
  %s1 = inlined_call_operand.hbm [shape: f32[256,128], index: 1, kind: input, shape index: {}]
  %s2 = inlined_call_operand.vmem [shape: f32[1,128], index: 2, kind: input, shape index: {}]
  %s3 = inlined_call_operand.hbm [shape: f32[128,128], index: 3, kind: input, shape index: {}]
  %s4 = inlined_call_operand.vmem [shape: f32[1,128], index: 4, kind: input, shape index: {}]
  %s5 = inlined_call_operand.hbm [shape: f32[512,128], index: 5, kind: output, shape index: {}]
  %s6 = sld [smem:[#allocation0]]
  $region65: #{tpu_custom_call.1} parent=0
    _
  %s8 = ssub.s32 1, %s6
  %s9 = scalar_select 0, %s8, %s6
  $region1: #{tpu_custom_call.1} parent=0
    #allocation2 [shape = 'u8[524288]{0}', space=vmem, size = 0x80000, scoped, tag = 'input window, operand 0']
    #allocation3 [shape = 's32[2]{0}', space=sflag, size = 0x8, scoped, tag = 'scoped memory for tpu_custom_call.1']
    #allocation4 [shape = 's32[2]{0}', space=sflag, size = 0x8, scoped, tag = 'scoped memory for tpu_custom_call.1']
    #allocation5 [shape = 'u8[131072]{0}', space=vmem, size = 0x20000, scoped, tag = 'input window, operand 1, single buffered']
    #allocation6 [shape = 's32[1]{0}', space=sflag, size = 0x4, scoped, tag = 'scoped memory for tpu_custom_call.1']
    #allocation7 [shape = 'u8[65536]{0}', space=vmem, size = 0x10000, scoped, tag = 'input window, operand 3, single buffered']
    #allocation8 [shape = 'u8[262144]{0}', space=vmem, size = 0x40000, scoped, tag = 'output window, operand 0']
    %10 = vsyncpa [#allocation3], 0
    %s11 = scalar_lea.sflag [#allocation3], 1
    %12 = vsyncpa %s11, 0
    %13 = vsyncpa [#allocation6], 0
    %14 = vsyncpa [#allocation4], 0
    %s15 = scalar_lea.sflag [#allocation4], 1
    %16 = vsyncpa %s15, 0
    loop: start=0, step=1, limit=4
    $region2: #{tpu_custom_call.1} parent=1 // loop_pre_header
      _
    $region3: #{tpu_custom_call.1} parent=1 // loop_header
      %s18 = sphi 0, %s22
      %p19 = scmp.ge.s32.totalorder %s18, 4
      %s28 = sphi 0, %s30
      %s31 = sphi 0, %s28
      %s32 = sphi 0, %s31
      %s48 = sphi 0, %s32
      %s52 = sphi 0, %s52
      %s54 = sphi 0, %s52
      %s55 = sphi 0, %s54
      %s69 = sphi 0, %s55
      %s73 = sphi 0, %s73
      %s75 = sphi 0, %s73
      %s76 = sphi 0, %s75
      %s90 = sphi 0, %s76
      %s94 = sphi 0, %s94
      %s96 = sphi 0, %s94
      %s97 = sphi 0, %s96
      %s111 = sphi 0, %s97
      %s115 = sphi 0, %s115
      %s117 = sphi 0, %s115
      %s118 = sphi 0, %s117
      %s132 = sphi 0, %s118
      %s138 = sphi 0, %s140
      %s141 = sphi 0, %s138
      %s142 = sphi 0, %s141
      %s158 = sphi 0, %s142
    $region4: #{tpu_custom_call.1} parent=1 // loop_header_branch
      %21 = sbr.rel (%p19) target = $region8
    $region5: #{tpu_custom_call.1} parent=1 // loop_body
      %s23 = ssub.s32 %s18, 1
      %s24 = ssub.s32 %s18, 2
      %s25 = sadd.s32 %s18, 1
      %s26 = ssub.s32 %s18, %s25
      %p27 = scmp.eq.s32.totalorder %s26, 0
      %s29 = sadd.s32 %s28, 1
      %s30 = scalar_select %p27, %s28, %s29
      %p33 = pneg %p27
      %p34 = scmp.eq.s32.totalorder %s18, 1
      %p35 = por %p33, %p34
      %p36 = scmp.ne.s32.totalorder %s28, %s31
      %p37 = scmp.eq.s32.totalorder %s18, 0
      %p38 = por %p36, %p37
      %p39 = scmp.ne.s32.totalorder %s28, %s31
      %p40 = scmp.eq.s32.totalorder %s23, 1
      %p41 = por %p39, %p40
      %p42 = scmp.ne.s32.totalorder %s31, %s32
      %p43 = scmp.eq.s32.totalorder %s23, 0
      %p44 = por %p42, %p43
      %p45 = scmp.ne.s32.totalorder %s31, %s32
      %p46 = scmp.eq.s32.totalorder %s24, 1
      %p47 = por %p45, %p46
      %p49 = scmp.ne.s32.totalorder %s32, %s48
      %p50 = scmp.eq.s32.totalorder %s24, 0
      %p51 = por %p49, %p50
      %s53 = sadd.s32 %s52, 1
      %p56 = scmp.eq.s32.totalorder %s18, 1
      %p57 = scmp.ne.s32.totalorder %s52, %s54
      %p58 = scmp.eq.s32.totalorder %s18, 0
      %p59 = por %p57, %p58
      %p60 = scmp.ne.s32.totalorder %s52, %s54
      %p61 = scmp.eq.s32.totalorder %s23, 1
      %p62 = por %p60, %p61
      %p63 = scmp.ne.s32.totalorder %s54, %s55
      %p64 = scmp.eq.s32.totalorder %s23, 0
      %p65 = por %p63, %p64
      %p66 = scmp.ne.s32.totalorder %s54, %s55
      %p67 = scmp.eq.s32.totalorder %s24, 1
      %p68 = por %p66, %p67
      %p70 = scmp.ne.s32.totalorder %s55, %s69
      %p71 = scmp.eq.s32.totalorder %s24, 0
      %p72 = por %p70, %p71
      %s74 = sadd.s32 %s73, 1
      %p77 = scmp.eq.s32.totalorder %s18, 1
      %p78 = scmp.ne.s32.totalorder %s73, %s75
      %p79 = scmp.eq.s32.totalorder %s18, 0
      %p80 = por %p78, %p79
      %p81 = scmp.ne.s32.totalorder %s73, %s75
      %p82 = scmp.eq.s32.totalorder %s23, 1
      %p83 = por %p81, %p82
      %p84 = scmp.ne.s32.totalorder %s75, %s76
      %p85 = scmp.eq.s32.totalorder %s23, 0
      %p86 = por %p84, %p85
      %p87 = scmp.ne.s32.totalorder %s75, %s76
      %p88 = scmp.eq.s32.totalorder %s24, 1
      %p89 = por %p87, %p88
      %p91 = scmp.ne.s32.totalorder %s76, %s90
      %p92 = scmp.eq.s32.totalorder %s24, 0
      %p93 = por %p91, %p92
      %s95 = sadd.s32 %s94, 1
      %p98 = scmp.eq.s32.totalorder %s18, 1
      %p99 = scmp.ne.s32.totalorder %s94, %s96
      %p100 = scmp.eq.s32.totalorder %s18, 0
      %p101 = por %p99, %p100
      %p102 = scmp.ne.s32.totalorder %s94, %s96
      %p103 = scmp.eq.s32.totalorder %s23, 1
      %p104 = por %p102, %p103
      %p105 = scmp.ne.s32.totalorder %s96, %s97
      %p106 = scmp.eq.s32.totalorder %s23, 0
      %p107 = por %p105, %p106
      %p108 = scmp.ne.s32.totalorder %s96, %s97
      %p109 = scmp.eq.s32.totalorder %s24, 1
      %p110 = por %p108, %p109
      %p112 = scmp.ne.s32.totalorder %s97, %s111
      %p113 = scmp.eq.s32.totalorder %s24, 0
      %p114 = por %p112, %p113
      %s116 = sadd.s32 %s115, 1
      %p119 = scmp.eq.s32.totalorder %s18, 1
      %p120 = scmp.ne.s32.totalorder %s115, %s117
      %p121 = scmp.eq.s32.totalorder %s18, 0
      %p122 = por %p120, %p121
      %p123 = scmp.ne.s32.totalorder %s115, %s117
      %p124 = scmp.eq.s32.totalorder %s23, 1
      %p125 = por %p123, %p124
      %p126 = scmp.ne.s32.totalorder %s117, %s118
      %p127 = scmp.eq.s32.totalorder %s23, 0
      %p128 = por %p126, %p127
      %p129 = scmp.ne.s32.totalorder %s117, %s118
      %p130 = scmp.eq.s32.totalorder %s24, 1
      %p131 = por %p129, %p130
      %p133 = scmp.ne.s32.totalorder %s118, %s132
      %p134 = scmp.eq.s32.totalorder %s24, 0
      %p135 = por %p133, %p134
      %s136 = ssub.s32 %s18, %s25
      %p137 = scmp.eq.s32.totalorder %s136, 0
      %s139 = sadd.s32 %s138, 1
      %s140 = scalar_select %p137, %s138, %s139
      %p143 = pneg %p137
      %p144 = scmp.eq.s32.totalorder %s18, 1
      %p145 = por %p143, %p144
      %p146 = scmp.ne.s32.totalorder %s138, %s141
      %p147 = scmp.eq.s32.totalorder %s18, 0
      %p148 = por %p146, %p147
      %p149 = scmp.ne.s32.totalorder %s138, %s141
      %p150 = scmp.eq.s32.totalorder %s23, 1
      %p151 = por %p149, %p150
      %p152 = scmp.ne.s32.totalorder %s141, %s142
      %p153 = scmp.eq.s32.totalorder %s23, 0
      %p154 = por %p152, %p153
      %p155 = scmp.ne.s32.totalorder %s141, %s142
      %p156 = scmp.eq.s32.totalorder %s24, 1
      %p157 = por %p155, %p156
      %p159 = scmp.ne.s32.totalorder %s142, %s158
      %p160 = scmp.eq.s32.totalorder %s24, 0
      %p161 = por %p159, %p160
      %p162 = scmp.le.s32.totalorder 1, %s18
      %p163 = scmp.lt.s32.totalorder %s18, 3
      %p164 = pnand %p162, %p163
      %p165 = pneg %p164
      // Predicated region
      $region9: #{tpu_custom_call.1} parent=5 // pred_check
        _
      $region10: #{tpu_custom_call.1} parent=5 // pred_check_branch
        %167 = sbr.rel (%p164) target = $region12
      $region11: #{tpu_custom_call.1} parent=5 // pred_region
        %s168 = ssub.s32 %s18, 1
        // Predicated region
        $region13: #{tpu_custom_call.1} parent=11 // pred_check
          %p169 = pneg %p65
        $region14: #{tpu_custom_call.1} parent=11 // pred_check_branch
          %171 = sbr.rel (%p169) target = $region16
        $region15: #{tpu_custom_call.1} parent=11 // pred_region
          %s173 = ssub.s32 4096, 4096
          %174 = vsyncadd [#allocation6], %s173
          %s175 = sshll.u32 [#allocation5], 4
          %s176 = int_to_ptr.vmem [resolvable:$true] %s175
          %181 = dma.hbm_to_vmem [thread:$0]  %s1, 4096, %s176, [#allocation6], 128, 128, 8
        $region16: #{tpu_custom_call.1} parent=11 // pred_fallthru
          _
        // Predicated region
        $region17: #{tpu_custom_call.1} parent=11 // pred_check
          %p182 = pneg %p86
        $region18: #{tpu_custom_call.1} parent=11 // pred_check_branch
          %184 = sbr.rel (%p182) target = $region20
        $region19: #{tpu_custom_call.1} parent=11 // pred_region
          _
        $region20: #{tpu_custom_call.1} parent=11 // pred_fallthru
          _
        // Predicated region
        $region21: #{tpu_custom_call.1} parent=11 // pred_check
          %p185 = pneg %p107
        $region22: #{tpu_custom_call.1} parent=11 // pred_check_branch
          %187 = sbr.rel (%p185) target = $region24
        $region23: #{tpu_custom_call.1} parent=11 // pred_region
          %s189 = ssub.s32 2048, 2048
          %190 = vsyncadd [#allocation6], %s189
          %s191 = sshll.u32 [#allocation7], 4
          %s192 = int_to_ptr.vmem [resolvable:$true] %s191
          %197 = dma.hbm_to_vmem [thread:$0]  %s3, 2048, %s192, [#allocation6], 128, 128, 8
        $region24: #{tpu_custom_call.1} parent=11 // pred_fallthru
          _
        // Predicated region
        $region25: #{tpu_custom_call.1} parent=11 // pred_check
          %p198 = pneg %p128
        $region26: #{tpu_custom_call.1} parent=11 // pred_check_branch
          %200 = sbr.rel (%p198) target = $region28
        $region27: #{tpu_custom_call.1} parent=11 // pred_region
          _
        $region28: #{tpu_custom_call.1} parent=11 // pred_fallthru
          _
      $region12: #{tpu_custom_call.1} parent=5 // pred_fallthru
        _
      %p201 = scmp.lt.s32.totalorder %s18, 2
      // Predicated region
      $region29: #{tpu_custom_call.1} parent=5 // pred_check
        %p202 = pneg %p201
      $region30: #{tpu_custom_call.1} parent=5 // pred_check_branch
        %204 = sbr.rel (%p202) target = $region32
      $region31: #{tpu_custom_call.1} parent=5 // pred_region
        // Predicated region
        $region33: #{tpu_custom_call.1} parent=31 // pred_check
          %p205 = pneg %p38
        $region34: #{tpu_custom_call.1} parent=31 // pred_check_branch
          %207 = sbr.rel (%p205) target = $region36
        $region35: #{tpu_custom_call.1} parent=31 // pred_region
          %s208 = sand.u32 %s28, 1
          %s209 = scalar_lea.sflag [#allocation3], %s208
          %s210 = sand.u32 %s28, 1
          %s211 = smul.addr %s210, 512
          %s212 = scalar_lea.vmem [#allocation2], %s211
          %s213 = smul.u32 32, %s18
          %s215 = ssub.s32 8192, 8192
          %216 = vsyncadd %s209, %s215
          %s217 = smul.addr %s213, 2
          %s218 = smul.addr %s217, 128
          %s219 = scalar_lea.hbm %s0, %s218
          %s220 = sshll.u32 %s212, 4
          %s221 = int_to_ptr.vmem [resolvable:$true] %s220
          %226 = dma.hbm_to_vmem [thread:$0]  %s219, 8192, %s221, %s209, 256, 256, 16
        $region36: #{tpu_custom_call.1} parent=31 // pred_fallthru
          _
      $region32: #{tpu_custom_call.1} parent=5 // pred_fallthru
        _
      %p227 = scmp.le.s32.totalorder 1, %s18
      %p228 = scmp.lt.s32.totalorder %s18, 3
      %p229 = pnand %p227, %p228
      %p230 = pneg %p229
      // Predicated region
      $region37: #{tpu_custom_call.1} parent=5 // pred_check
        _
      $region38: #{tpu_custom_call.1} parent=5 // pred_check_branch
        %232 = sbr.rel (%p229) target = $region40
      $region39: #{tpu_custom_call.1} parent=5 // pred_region
        %s233 = ssub.s32 %s18, 1
        %s234 = sand.u32 %s31, 1
        %s235 = scalar_lea.sflag [#allocation3], %s234
        %s236 = sand.u32 %s31, 1
        %s237 = smul.addr %s236, 512
        %s238 = scalar_lea.vmem [#allocation2], %s237
        // Predicated region
        $region41: #{tpu_custom_call.1} parent=39 // pred_check
          %p239 = pneg %p44
        $region42: #{tpu_custom_call.1} parent=39 // pred_check_branch
          %241 = sbr.rel (%p239) target = $region44
        $region43: #{tpu_custom_call.1} parent=39 // pred_region
          %242 = dma.done %s235, 8192
        $region44: #{tpu_custom_call.1} parent=39 // pred_fallthru
          _
        // Predicated region
        $region45: #{tpu_custom_call.1} parent=39 // pred_check
          %p243 = pneg %p65
        $region46: #{tpu_custom_call.1} parent=39 // pred_check_branch
          %245 = sbr.rel (%p243) target = $region48
        $region47: #{tpu_custom_call.1} parent=39 // pred_region
          %246 = dma.done [#allocation6], 4096
        $region48: #{tpu_custom_call.1} parent=39 // pred_fallthru
          _
        // Predicated region
        $region49: #{tpu_custom_call.1} parent=39 // pred_check
          %p247 = pneg %p107
        $region50: #{tpu_custom_call.1} parent=39 // pred_check_branch
          %249 = sbr.rel (%p247) target = $region52
        $region51: #{tpu_custom_call.1} parent=39 // pred_region
          %250 = dma.done [#allocation6], 2048
        $region52: #{tpu_custom_call.1} parent=39 // pred_fallthru
          _
        %s251 = sand.u32 %s31, 1
        %s252 = scalar_lea.sflag [#allocation3], %s251
        %s253 = sand.u32 %s31, 1
        %s254 = smul.addr %s253, 512
        %s255 = scalar_lea.vmem [#allocation2], %s254
        %p256 = pneg %p44
        %p257 = pneg %p41
        %p258 = pneg %p65
        %p259 = pneg %p62
        %p260 = pneg %p86
        %p261 = pneg %p83
        %p262 = pneg %p107
        %p263 = pneg %p104
        %p264 = pneg %p128
        %p265 = pneg %p125
        %p266 = pneg %p154
        %p267 = pneg %p151
        %s268 = sand.u32 %s141, 1
        %s269 = scalar_lea.sflag [#allocation4], %s268
        %s270 = sand.u32 %s141, 1
        %s271 = smul.addr %s270, 256
        %s272 = scalar_lea.vmem [#allocation8], %s271
        %s273 = smul.u32 32, %s23
        %s274 = smul.u32 32, %s23
        %v275 = vld [vmem:[%s238] sm:$0xff]
        %v276 = vld [vmem:[%s238 + $0x8] sm:$0xff]
        %v277 = vld [vmem:[%s238 + $0x10] sm:$0xff]
        %v278 = vld [vmem:[%s238 + $0x18] sm:$0xff]
        %v279 = vld [vmem:[%s238 + $0x20] sm:$0xff]
        %v280 = vld [vmem:[%s238 + $0x28] sm:$0xff]
        %v281 = vld [vmem:[%s238 + $0x30] sm:$0xff]
        %v282 = vld [vmem:[%s238 + $0x38] sm:$0xff]
        %v283 = vld [vmem:[%s238 + $0x40] sm:$0xff]
        %v284 = vld [vmem:[%s238 + $0x48] sm:$0xff]
        %v285 = vld [vmem:[%s238 + $0x50] sm:$0xff]
        %v286 = vld [vmem:[%s238 + $0x58] sm:$0xff]
        %v287 = vld [vmem:[%s238 + $0x60] sm:$0xff]
        %v288 = vld [vmem:[%s238 + $0x68] sm:$0xff]
        %v289 = vld [vmem:[%s238 + $0x70] sm:$0xff]
        %v290 = vld [vmem:[%s238 + $0x78] sm:$0xff]
        %v291 = vld [vmem:[%s238 + $0x80] sm:$0xff]
        %v292 = vld [vmem:[%s238 + $0x88] sm:$0xff]
        %v293 = vld [vmem:[%s238 + $0x90] sm:$0xff]
        %v294 = vld [vmem:[%s238 + $0x98] sm:$0xff]
        %v295 = vld [vmem:[%s238 + $0xa0] sm:$0xff]
        %v296 = vld [vmem:[%s238 + $0xa8] sm:$0xff]
        %v297 = vld [vmem:[%s238 + $0xb0] sm:$0xff]
        %v298 = vld [vmem:[%s238 + $0xb8] sm:$0xff]
        %v299 = vld [vmem:[%s238 + $0xc0] sm:$0xff]
        %v300 = vld [vmem:[%s238 + $0xc8] sm:$0xff]
        %v301 = vld [vmem:[%s238 + $0xd0] sm:$0xff]
        %v302 = vld [vmem:[%s238 + $0xd8] sm:$0xff]
        %v303 = vld [vmem:[%s238 + $0xe0] sm:$0xff]
        %v304 = vld [vmem:[%s238 + $0xe8] sm:$0xff]
        %v305 = vld [vmem:[%s238 + $0xf0] sm:$0xff]
        %v306 = vld [vmem:[%s238 + $0xf8] sm:$0xff]
        %v307 = vld [vmem:[%s238 + $0x100] sm:$0xff]
        %v308 = vld [vmem:[%s238 + $0x108] sm:$0xff]
        %v309 = vld [vmem:[%s238 + $0x110] sm:$0xff]
        %v310 = vld [vmem:[%s238 + $0x118] sm:$0xff]
        %v311 = vld [vmem:[%s238 + $0x120] sm:$0xff]
        %v312 = vld [vmem:[%s238 + $0x128] sm:$0xff]
        %v313 = vld [vmem:[%s238 + $0x130] sm:$0xff]
        %v314 = vld [vmem:[%s238 + $0x138] sm:$0xff]
        %v315 = vld [vmem:[%s238 + $0x140] sm:$0xff]
        %v316 = vld [vmem:[%s238 + $0x148] sm:$0xff]
        %v317 = vld [vmem:[%s238 + $0x150] sm:$0xff]
        %v318 = vld [vmem:[%s238 + $0x158] sm:$0xff]
        %v319 = vld [vmem:[%s238 + $0x160] sm:$0xff]
        %v320 = vld [vmem:[%s238 + $0x168] sm:$0xff]
        %v321 = vld [vmem:[%s238 + $0x170] sm:$0xff]
        %v322 = vld [vmem:[%s238 + $0x178] sm:$0xff]
        %v323 = vld [vmem:[%s238 + $0x180] sm:$0xff]
        %v324 = vld [vmem:[%s238 + $0x188] sm:$0xff]
        %v325 = vld [vmem:[%s238 + $0x190] sm:$0xff]
        %v326 = vld [vmem:[%s238 + $0x198] sm:$0xff]
        %v327 = vld [vmem:[%s238 + $0x1a0] sm:$0xff]
        %v328 = vld [vmem:[%s238 + $0x1a8] sm:$0xff]
        %v329 = vld [vmem:[%s238 + $0x1b0] sm:$0xff]
        %v330 = vld [vmem:[%s238 + $0x1b8] sm:$0xff]
        %v331 = vld [vmem:[%s238 + $0x1c0] sm:$0xff]
        %v332 = vld [vmem:[%s238 + $0x1c8] sm:$0xff]
        %v333 = vld [vmem:[%s238 + $0x1d0] sm:$0xff]
        %v334 = vld [vmem:[%s238 + $0x1d8] sm:$0xff]
        %v335 = vld [vmem:[%s238 + $0x1e0] sm:$0xff]
        %v336 = vld [vmem:[%s238 + $0x1e8] sm:$0xff]
        %v337 = vld [vmem:[%s238 + $0x1f0] sm:$0xff]
        %v338 = vld [vmem:[%s238 + $0x1f8] sm:$0xff]
        %v339 = vld [vmem:[#allocation5] sm:$0xff]
        %v340 = vld [vmem:[#allocation5 + $0x8] sm:$0xff]
        %v341 = vld [vmem:[#allocation5 + $0x10] sm:$0xff]
        %v342 = vld [vmem:[#allocation5 + $0x18] sm:$0xff]
        %v343 = vld [vmem:[#allocation5 + $0x20] sm:$0xff]
        %v344 = vld [vmem:[#allocation5 + $0x28] sm:$0xff]
        %v345 = vld [vmem:[#allocation5 + $0x30] sm:$0xff]
        %v346 = vld [vmem:[#allocation5 + $0x38] sm:$0xff]
        %v347 = vld [vmem:[#allocation5 + $0x40] sm:$0xff]
        %v348 = vld [vmem:[#allocation5 + $0x48] sm:$0xff]
        %v349 = vld [vmem:[#allocation5 + $0x50] sm:$0xff]
        %v350 = vld [vmem:[#allocation5 + $0x58] sm:$0xff]
        %v351 = vld [vmem:[#allocation5 + $0x60] sm:$0xff]
        %v352 = vld [vmem:[#allocation5 + $0x68] sm:$0xff]
        %v353 = vld [vmem:[#allocation5 + $0x70] sm:$0xff]
        %v354 = vld [vmem:[#allocation5 + $0x78] sm:$0xff]
        %v355 = vld [vmem:[#allocation5 + $0x80] sm:$0xff]
        %v356 = vld [vmem:[#allocation5 + $0x88] sm:$0xff]
        %v357 = vld [vmem:[#allocation5 + $0x90] sm:$0xff]
        %v358 = vld [vmem:[#allocation5 + $0x98] sm:$0xff]
        %v359 = vld [vmem:[#allocation5 + $0xa0] sm:$0xff]
        %v360 = vld [vmem:[#allocation5 + $0xa8] sm:$0xff]
        %v361 = vld [vmem:[#allocation5 + $0xb0] sm:$0xff]
        %v362 = vld [vmem:[#allocation5 + $0xb8] sm:$0xff]
        %v363 = vld [vmem:[#allocation5 + $0xc0] sm:$0xff]
        %v364 = vld [vmem:[#allocation5 + $0xc8] sm:$0xff]
        %v365 = vld [vmem:[#allocation5 + $0xd0] sm:$0xff]
        %v366 = vld [vmem:[#allocation5 + $0xd8] sm:$0xff]
        %v367 = vld [vmem:[#allocation5 + $0xe0] sm:$0xff]
        %v368 = vld [vmem:[#allocation5 + $0xe8] sm:$0xff]
        %v369 = vld [vmem:[#allocation5 + $0xf0] sm:$0xff]
        %v370 = vld [vmem:[#allocation5 + $0xf8] sm:$0xff]
        %v371 = vld [vmem:[%s2] sm:$0x1]
        %v373 = vlaneseq
        %v374 = vshrl.u32 %v373, 7
        %v375 = vsub.s32 0, %v374
        %v376 = vrot.slane %v371, %v375
        %378 = vmatprep.subr.mxu0 0.0
        %379 = vmatpush1.msra.mxu0 %v354
        %380 = vmatprep.subr.mxu0 0.0
        %381 = vmatpush1.msra.mxu0 %v353
        %382 = vmatprep.subr.mxu0 0.0
        %383 = vmatpush1.msra.mxu0 %v352
        %384 = vmatprep.subr.mxu0 0.0
        %385 = vmatpush1.msra.mxu0 %v351
        %386 = vmatprep.subr.mxu0 0.0
        %387 = vmatpush1.msra.mxu0 %v350
        %388 = vmatprep.subr.mxu0 0.0
        %389 = vmatpush1.msra.mxu0 %v349
        %390 = vmatprep.subr.mxu0 0.0
        %391 = vmatpush1.msra.mxu0 %v348
        %392 = vmatprep.subr.mxu0 0.0
        %393 = vmatpush1.msra.mxu0 %v347
        %394 = vmatprep.subr.mxu0 0.0
        %395 = vmatpush1.msra.mxu0 %v346
        %396 = vmatprep.subr.mxu0 0.0
        %397 = vmatpush1.msra.mxu0 %v345
        %398 = vmatprep.subr.mxu0 0.0
        %399 = vmatpush1.msra.mxu0 %v344
        %400 = vmatprep.subr.mxu0 0.0
        %401 = vmatpush1.msra.mxu0 %v343
        %402 = vmatprep.subr.mxu0 0.0
        %403 = vmatpush1.msra.mxu0 %v342
        %404 = vmatprep.subr.mxu0 0.0
        %405 = vmatpush1.msra.mxu0 %v341
        %406 = vmatprep.subr.mxu0 0.0
        %407 = vmatpush1.msra.mxu0 %v340
        %408 = vmatprep.subr.mxu0 0.0
        %409 = vmatpush1.msra.mxu0 %v339
        %410 = vmatprep.subr.mxu0 0.0
        %411 = vmatpush2.msra.mxu0 %v370
        %412 = vmatprep.subr.mxu0 0.0
        %413 = vmatpush2.msra.mxu0 %v369
        %414 = vmatprep.subr.mxu0 0.0
        %415 = vmatpush2.msra.mxu0 %v368
        %416 = vmatprep.subr.mxu0 0.0
        %417 = vmatpush2.msra.mxu0 %v367
        %418 = vmatprep.subr.mxu0 0.0
        %419 = vmatpush2.msra.mxu0 %v366
        %420 = vmatprep.subr.mxu0 0.0
        %421 = vmatpush2.msra.mxu0 %v365
        %422 = vmatprep.subr.mxu0 0.0
        %423 = vmatpush2.msra.mxu0 %v364
        %424 = vmatprep.subr.mxu0 0.0
        %425 = vmatpush2.msra.mxu0 %v363
        %426 = vmatprep.subr.mxu0 0.0
        %427 = vmatpush2.msra.mxu0 %v362
        %428 = vmatprep.subr.mxu0 0.0
        %429 = vmatpush2.msra.mxu0 %v361
        %430 = vmatprep.subr.mxu0 0.0
        %431 = vmatpush2.msra.mxu0 %v360
        %432 = vmatprep.subr.mxu0 0.0
        %433 = vmatpush2.msra.mxu0 %v359
        %434 = vmatprep.subr.mxu0 0.0
        %435 = vmatpush2.msra.mxu0 %v358
        %436 = vmatprep.subr.mxu0 0.0
        %437 = vmatpush2.msra.mxu0 %v357
        %438 = vmatprep.subr.mxu0 0.0
        %439 = vmatpush2.msra.mxu0 %v356
        %440 = vmatprep.subr.mxu0 0.0
        %441 = vmatpush2.msra.mxu0 %v355
        %442 = vmatprep.mubr.f32.mxu0 %v276
        %443 = vmatmul.mubr.f32.gmra.mxu0 %v275
        %v444 = vpop.f32.mrf.mxu0
        %v445 = vadd.f32 %v376, %v444
        %v446 = vpop.f32.mrf.mxu0
        %447 = vmatprep.mubr.f32.mxu0 %v278
        %448 = vmatmul.mubr.f32.gmra.mxu0 %v277
        %v449 = vpop.f32.mrf.mxu0
        %v450 = vadd.f32 %v376, %v449
        %v451 = vpop.f32.mrf.mxu0
        %452 = vmatprep.mubr.f32.mxu0 %v280
        %453 = vmatmul.mubr.f32.gmra.mxu0 %v279
        %v454 = vpop.f32.mrf.mxu0
        %v455 = vadd.f32 %v376, %v454
        %v456 = vpop.f32.mrf.mxu0
        %457 = vmatprep.mubr.f32.mxu0 %v282
        %458 = vmatmul.mubr.f32.gmra.mxu0 %v281
        %v459 = vpop.f32.mrf.mxu0
        %v460 = vadd.f32 %v376, %v459
        %v461 = vpop.f32.mrf.mxu0
        %462 = vmatprep.mubr.f32.mxu0 %v284
        %463 = vmatmul.mubr.f32.gmra.mxu0 %v283
        %v464 = vpop.f32.mrf.mxu0
        %v465 = vadd.f32 %v376, %v464
        %v466 = vpop.f32.mrf.mxu0
        %467 = vmatprep.mubr.f32.mxu0 %v286
        %468 = vmatmul.mubr.f32.gmra.mxu0 %v285
        %v469 = vpop.f32.mrf.mxu0
        %v470 = vadd.f32 %v376, %v469
        %v471 = vpop.f32.mrf.mxu0
        %472 = vmatprep.mubr.f32.mxu0 %v288
        %473 = vmatmul.mubr.f32.gmra.mxu0 %v287
        %v474 = vpop.f32.mrf.mxu0
        %v475 = vadd.f32 %v376, %v474
        %v476 = vpop.f32.mrf.mxu0
        %477 = vmatprep.mubr.f32.mxu0 %v290
        %478 = vmatmul.mubr.f32.gmra.mxu0 %v289
        %v479 = vpop.f32.mrf.mxu0
        %v480 = vadd.f32 %v376, %v479
        %v481 = vpop.f32.mrf.mxu0
        %482 = vmatprep.mubr.f32.mxu0 %v292
        %483 = vmatmul.mubr.f32.gmra.mxu0 %v291
        %v484 = vpop.f32.mrf.mxu0
        %v485 = vadd.f32 %v376, %v484
        %v486 = vpop.f32.mrf.mxu0
        %487 = vmatprep.mubr.f32.mxu0 %v294
        %488 = vmatmul.mubr.f32.gmra.mxu0 %v293
        %v489 = vpop.f32.mrf.mxu0
        %v490 = vadd.f32 %v376, %v489
        %v491 = vpop.f32.mrf.mxu0
        %492 = vmatprep.mubr.f32.mxu0 %v296
        %493 = vmatmul.mubr.f32.gmra.mxu0 %v295
        %v494 = vpop.f32.mrf.mxu0
        %v495 = vadd.f32 %v376, %v494
        %v496 = vpop.f32.mrf.mxu0
        %497 = vmatprep.mubr.f32.mxu0 %v298
        %498 = vmatmul.mubr.f32.gmra.mxu0 %v297
        %v499 = vpop.f32.mrf.mxu0
        %v500 = vadd.f32 %v376, %v499
        %v501 = vpop.f32.mrf.mxu0
        %502 = vmatprep.mubr.f32.mxu0 %v300
        %503 = vmatmul.mubr.f32.gmra.mxu0 %v299
        %v504 = vpop.f32.mrf.mxu0
        %v505 = vadd.f32 %v376, %v504
        %v506 = vpop.f32.mrf.mxu0
        %507 = vmatprep.mubr.f32.mxu0 %v302
        %508 = vmatmul.mubr.f32.gmra.mxu0 %v301
        %v509 = vpop.f32.mrf.mxu0
        %v510 = vadd.f32 %v376, %v509
        %v511 = vpop.f32.mrf.mxu0
        %512 = vmatprep.mubr.f32.mxu0 %v304
        %513 = vmatmul.mubr.f32.gmra.mxu0 %v303
        %v514 = vpop.f32.mrf.mxu0
        %v515 = vadd.f32 %v376, %v514
        %v516 = vpop.f32.mrf.mxu0
        %517 = vmatprep.mubr.f32.mxu0 %v306
        %518 = vmatmul.mubr.f32.gmra.mxu0 %v305
        %v519 = vpop.f32.mrf.mxu0
        %v520 = vadd.f32 %v376, %v519
        %v521 = vpop.f32.mrf.mxu0
        %522 = vmatprep.mubr.f32.mxu0 %v308
        %523 = vmatmul.mubr.f32.gmra.mxu0 %v307
        %v524 = vpop.f32.mrf.mxu0
        %v525 = vadd.f32 %v376, %v524
        %v526 = vpop.f32.mrf.mxu0
        %527 = vmatprep.mubr.f32.mxu0 %v310
        %528 = vmatmul.mubr.f32.gmra.mxu0 %v309
        %v529 = vpop.f32.mrf.mxu0
        %v530 = vadd.f32 %v376, %v529
        %v531 = vpop.f32.mrf.mxu0
        %532 = vmatprep.mubr.f32.mxu0 %v312
        %533 = vmatmul.mubr.f32.gmra.mxu0 %v311
        %v534 = vpop.f32.mrf.mxu0
        %v535 = vadd.f32 %v376, %v534
        %v536 = vpop.f32.mrf.mxu0
        %537 = vmatprep.mubr.f32.mxu0 %v314
        %538 = vmatmul.mubr.f32.gmra.mxu0 %v313
        %v539 = vpop.f32.mrf.mxu0
        %v540 = vadd.f32 %v376, %v539
        %v541 = vpop.f32.mrf.mxu0
        %542 = vmatprep.mubr.f32.mxu0 %v316
        %543 = vmatmul.mubr.f32.gmra.mxu0 %v315
        %v544 = vpop.f32.mrf.mxu0
        %v545 = vadd.f32 %v376, %v544
        %v546 = vpop.f32.mrf.mxu0
        %547 = vmatprep.mubr.f32.mxu0 %v318
        %548 = vmatmul.mubr.f32.gmra.mxu0 %v317
        %v549 = vpop.f32.mrf.mxu0
        %v550 = vadd.f32 %v376, %v549
        %v551 = vpop.f32.mrf.mxu0
        %552 = vmatprep.mubr.f32.mxu0 %v320
        %553 = vmatmul.mubr.f32.gmra.mxu0 %v319
        %v554 = vpop.f32.mrf.mxu0
        %v555 = vadd.f32 %v376, %v554
        %v556 = vpop.f32.mrf.mxu0
        %557 = vmatprep.mubr.f32.mxu0 %v322
        %558 = vmatmul.mubr.f32.gmra.mxu0 %v321
        %v559 = vpop.f32.mrf.mxu0
        %v560 = vadd.f32 %v376, %v559
        %v561 = vpop.f32.mrf.mxu0
        %562 = vmatprep.mubr.f32.mxu0 %v324
        %563 = vmatmul.mubr.f32.gmra.mxu0 %v323
        %v564 = vpop.f32.mrf.mxu0
        %v565 = vadd.f32 %v376, %v564
        %v566 = vpop.f32.mrf.mxu0
        %567 = vmatprep.mubr.f32.mxu0 %v326
        %568 = vmatmul.mubr.f32.gmra.mxu0 %v325
        %v569 = vpop.f32.mrf.mxu0
        %v570 = vadd.f32 %v376, %v569
        %v571 = vpop.f32.mrf.mxu0
        %572 = vmatprep.mubr.f32.mxu0 %v328
        %573 = vmatmul.mubr.f32.gmra.mxu0 %v327
        %v574 = vpop.f32.mrf.mxu0
        %v575 = vadd.f32 %v376, %v574
        %v576 = vpop.f32.mrf.mxu0
        %577 = vmatprep.mubr.f32.mxu0 %v330
        %578 = vmatmul.mubr.f32.gmra.mxu0 %v329
        %v579 = vpop.f32.mrf.mxu0
        %v580 = vadd.f32 %v376, %v579
        %v581 = vpop.f32.mrf.mxu0
        %582 = vmatprep.mubr.f32.mxu0 %v332
        %583 = vmatmul.mubr.f32.gmra.mxu0 %v331
        %v584 = vpop.f32.mrf.mxu0
        %v585 = vadd.f32 %v376, %v584
        %v586 = vpop.f32.mrf.mxu0
        %587 = vmatprep.mubr.f32.mxu0 %v334
        %588 = vmatmul.mubr.f32.gmra.mxu0 %v333
        %v589 = vpop.f32.mrf.mxu0
        %v590 = vadd.f32 %v376, %v589
        %v591 = vpop.f32.mrf.mxu0
        %592 = vmatprep.mubr.f32.mxu0 %v336
        %593 = vmatmul.mubr.f32.gmra.mxu0 %v335
        %v594 = vpop.f32.mrf.mxu0
        %v595 = vadd.f32 %v376, %v594
        %v596 = vpop.f32.mrf.mxu0
        %597 = vmatprep.mubr.f32.mxu0 %v338
        %598 = vmatmul.mubr.f32.gmra.mxu0 %v337
        %v599 = vpop.f32.mrf.mxu0
        %v600 = vadd.f32 %v376, %v599
        %v601 = vpop.f32.mrf.mxu0
        %602 = vdwg.mxu0
        %v603 = vmax.f32 %v445, 0.0
        %v604 = vmax.f32 %v450, 0.0
        %v605 = vmax.f32 %v455, 0.0
        %v606 = vmax.f32 %v460, 0.0
        %v607 = vmax.f32 %v465, 0.0
        %v608 = vmax.f32 %v470, 0.0
        %v609 = vmax.f32 %v475, 0.0
        %v610 = vmax.f32 %v480, 0.0
        %v611 = vmax.f32 %v485, 0.0
        %v612 = vmax.f32 %v490, 0.0
        %v613 = vmax.f32 %v495, 0.0
        %v614 = vmax.f32 %v500, 0.0
        %v615 = vmax.f32 %v505, 0.0
        %v616 = vmax.f32 %v510, 0.0
        %v617 = vmax.f32 %v515, 0.0
        %v618 = vmax.f32 %v520, 0.0
        %v619 = vmax.f32 %v525, 0.0
        %v620 = vmax.f32 %v530, 0.0
        %v621 = vmax.f32 %v535, 0.0
        %v622 = vmax.f32 %v540, 0.0
        %v623 = vmax.f32 %v545, 0.0
        %v624 = vmax.f32 %v550, 0.0
        %v625 = vmax.f32 %v555, 0.0
        %v626 = vmax.f32 %v560, 0.0
        %v627 = vmax.f32 %v565, 0.0
        %v628 = vmax.f32 %v570, 0.0
        %v629 = vmax.f32 %v575, 0.0
        %v630 = vmax.f32 %v580, 0.0
        %v631 = vmax.f32 %v585, 0.0
        %v632 = vmax.f32 %v590, 0.0
        %v633 = vmax.f32 %v595, 0.0
        %v634 = vmax.f32 %v600, 0.0
        %v635 = vld [vmem:[#allocation7] sm:$0xff]
        %v636 = vld [vmem:[#allocation7 + $0x8] sm:$0xff]
        %v637 = vld [vmem:[#allocation7 + $0x10] sm:$0xff]
        %v638 = vld [vmem:[#allocation7 + $0x18] sm:$0xff]
        %v639 = vld [vmem:[#allocation7 + $0x20] sm:$0xff]
        %v640 = vld [vmem:[#allocation7 + $0x28] sm:$0xff]
        %v641 = vld [vmem:[#allocation7 + $0x30] sm:$0xff]
        %v642 = vld [vmem:[#allocation7 + $0x38] sm:$0xff]
        %v643 = vld [vmem:[#allocation7 + $0x40] sm:$0xff]
        %v644 = vld [vmem:[#allocation7 + $0x48] sm:$0xff]
        %v645 = vld [vmem:[#allocation7 + $0x50] sm:$0xff]
        %v646 = vld [vmem:[#allocation7 + $0x58] sm:$0xff]
        %v647 = vld [vmem:[#allocation7 + $0x60] sm:$0xff]
        %v648 = vld [vmem:[#allocation7 + $0x68] sm:$0xff]
        %v649 = vld [vmem:[#allocation7 + $0x70] sm:$0xff]
        %v650 = vld [vmem:[#allocation7 + $0x78] sm:$0xff]
        %v651 = vld [vmem:[%s4] sm:$0x1]
        %v653 = vlaneseq
        %v654 = vshrl.u32 %v653, 7
        %v655 = vsub.s32 0, %v654
        %v656 = vrot.slane %v651, %v655
        %658 = vmatprep.subr.mxu0 0.0
        %659 = vmatpush1.msra.mxu0 %v650
        %660 = vmatprep.subr.mxu0 0.0
        %661 = vmatpush1.msra.mxu0 %v649
        %662 = vmatprep.subr.mxu0 0.0
        %663 = vmatpush1.msra.mxu0 %v648
        %664 = vmatprep.subr.mxu0 0.0
        %665 = vmatpush1.msra.mxu0 %v647
        %666 = vmatprep.subr.mxu0 0.0
        %667 = vmatpush1.msra.mxu0 %v646
        %668 = vmatprep.subr.mxu0 0.0
        %669 = vmatpush1.msra.mxu0 %v645
        %670 = vmatprep.subr.mxu0 0.0
        %671 = vmatpush1.msra.mxu0 %v644
        %672 = vmatprep.subr.mxu0 0.0
        %673 = vmatpush1.msra.mxu0 %v643
        %674 = vmatprep.subr.mxu0 0.0
        %675 = vmatpush1.msra.mxu0 %v642
        %676 = vmatprep.subr.mxu0 0.0
        %677 = vmatpush1.msra.mxu0 %v641
        %678 = vmatprep.subr.mxu0 0.0
        %679 = vmatpush1.msra.mxu0 %v640
        %680 = vmatprep.subr.mxu0 0.0
        %681 = vmatpush1.msra.mxu0 %v639
        %682 = vmatprep.subr.mxu0 0.0
        %683 = vmatpush1.msra.mxu0 %v638
        %684 = vmatprep.subr.mxu0 0.0
        %685 = vmatpush1.msra.mxu0 %v637
        %686 = vmatprep.subr.mxu0 0.0
        %687 = vmatpush1.msra.mxu0 %v636
        %688 = vmatprep.subr.mxu0 0.0
        %689 = vmatpush1.msra.mxu0 %v635
        %690 = vmatprep.subr.mxu0 0.0
        %691 = vmatpush2.msra.mxu0 0.0
        %692 = vmatprep.subr.mxu0 0.0
        %693 = vmatpush2.msra.mxu0 0.0
        %694 = vmatprep.subr.mxu0 0.0
        %695 = vmatpush2.msra.mxu0 0.0
        %696 = vmatprep.subr.mxu0 0.0
        %697 = vmatpush2.msra.mxu0 0.0
        %698 = vmatprep.subr.mxu0 0.0
        %699 = vmatpush2.msra.mxu0 0.0
        %700 = vmatprep.subr.mxu0 0.0
        %701 = vmatpush2.msra.mxu0 0.0
        %702 = vmatprep.subr.mxu0 0.0
        %703 = vmatpush2.msra.mxu0 0.0
        %704 = vmatprep.subr.mxu0 0.0
        %705 = vmatpush2.msra.mxu0 0.0
        %706 = vmatprep.subr.mxu0 0.0
        %707 = vmatpush2.msra.mxu0 0.0
        %708 = vmatprep.subr.mxu0 0.0
        %709 = vmatpush2.msra.mxu0 0.0
        %710 = vmatprep.subr.mxu0 0.0
        %711 = vmatpush2.msra.mxu0 0.0
        %712 = vmatprep.subr.mxu0 0.0
        %713 = vmatpush2.msra.mxu0 0.0
        %714 = vmatprep.subr.mxu0 0.0
        %715 = vmatpush2.msra.mxu0 0.0
        %716 = vmatprep.subr.mxu0 0.0
        %717 = vmatpush2.msra.mxu0 0.0
        %718 = vmatprep.subr.mxu0 0.0
        %719 = vmatpush2.msra.mxu0 0.0
        %720 = vmatprep.subr.mxu0 0.0
        %721 = vmatpush2.msra.mxu0 0.0
        %722 = vmatprep.mubr.f32.mxu0 0.0
        %723 = vmatmul.mubr.f32.gmra.mxu0 %v603
        %v724 = vpop.f32.mrf.mxu0
        %v725 = vadd.f32 %v656, %v724
        %v726 = vpop.f32.mrf.mxu0
        %727 = vmatprep.mubr.f32.mxu0 0.0
        %728 = vmatmul.mubr.f32.gmra.mxu0 %v604
        %v729 = vpop.f32.mrf.mxu0
        %v730 = vadd.f32 %v656, %v729
        %v731 = vpop.f32.mrf.mxu0
        %732 = vmatprep.mubr.f32.mxu0 0.0
        %733 = vmatmul.mubr.f32.gmra.mxu0 %v605
        %v734 = vpop.f32.mrf.mxu0
        %v735 = vadd.f32 %v656, %v734
        %v736 = vpop.f32.mrf.mxu0
        %737 = vmatprep.mubr.f32.mxu0 0.0
        %738 = vmatmul.mubr.f32.gmra.mxu0 %v606
        %v739 = vpop.f32.mrf.mxu0
        %v740 = vadd.f32 %v656, %v739
        %v741 = vpop.f32.mrf.mxu0
        %742 = vmatprep.mubr.f32.mxu0 0.0
        %743 = vmatmul.mubr.f32.gmra.mxu0 %v607
        %v744 = vpop.f32.mrf.mxu0
        %v745 = vadd.f32 %v656, %v744
        %v746 = vpop.f32.mrf.mxu0
        %747 = vmatprep.mubr.f32.mxu0 0.0
        %748 = vmatmul.mubr.f32.gmra.mxu0 %v608
        %v749 = vpop.f32.mrf.mxu0
        %v750 = vadd.f32 %v656, %v749
        %v751 = vpop.f32.mrf.mxu0
        %752 = vmatprep.mubr.f32.mxu0 0.0
        %753 = vmatmul.mubr.f32.gmra.mxu0 %v609
        %v754 = vpop.f32.mrf.mxu0
        %v755 = vadd.f32 %v656, %v754
        %v756 = vpop.f32.mrf.mxu0
        %757 = vmatprep.mubr.f32.mxu0 0.0
        %758 = vmatmul.mubr.f32.gmra.mxu0 %v610
        %v759 = vpop.f32.mrf.mxu0
        %v760 = vadd.f32 %v656, %v759
        %v761 = vpop.f32.mrf.mxu0
        %762 = vmatprep.mubr.f32.mxu0 0.0
        %763 = vmatmul.mubr.f32.gmra.mxu0 %v611
        %v764 = vpop.f32.mrf.mxu0
        %v765 = vadd.f32 %v656, %v764
        %v766 = vpop.f32.mrf.mxu0
        %767 = vmatprep.mubr.f32.mxu0 0.0
        %768 = vmatmul.mubr.f32.gmra.mxu0 %v612
        %v769 = vpop.f32.mrf.mxu0
        %v770 = vadd.f32 %v656, %v769
        %v771 = vpop.f32.mrf.mxu0
        %772 = vmatprep.mubr.f32.mxu0 0.0
        %773 = vmatmul.mubr.f32.gmra.mxu0 %v613
        %v774 = vpop.f32.mrf.mxu0
        %v775 = vadd.f32 %v656, %v774
        %v776 = vpop.f32.mrf.mxu0
        %777 = vmatprep.mubr.f32.mxu0 0.0
        %778 = vmatmul.mubr.f32.gmra.mxu0 %v614
        %v779 = vpop.f32.mrf.mxu0
        %v780 = vadd.f32 %v656, %v779
        %v781 = vpop.f32.mrf.mxu0
        %782 = vmatprep.mubr.f32.mxu0 0.0
        %783 = vmatmul.mubr.f32.gmra.mxu0 %v615
        %v784 = vpop.f32.mrf.mxu0
        %v785 = vadd.f32 %v656, %v784
        %v786 = vpop.f32.mrf.mxu0
        %787 = vmatprep.mubr.f32.mxu0 0.0
        %788 = vmatmul.mubr.f32.gmra.mxu0 %v616
        %v789 = vpop.f32.mrf.mxu0
        %v790 = vadd.f32 %v656, %v789
        %v791 = vpop.f32.mrf.mxu0
        %792 = vmatprep.mubr.f32.mxu0 0.0
        %793 = vmatmul.mubr.f32.gmra.mxu0 %v617
        %v794 = vpop.f32.mrf.mxu0
        %v795 = vadd.f32 %v656, %v794
        %v796 = vpop.f32.mrf.mxu0
        %797 = vmatprep.mubr.f32.mxu0 0.0
        %798 = vmatmul.mubr.f32.gmra.mxu0 %v618
        %v799 = vpop.f32.mrf.mxu0
        %v800 = vadd.f32 %v656, %v799
        %v801 = vpop.f32.mrf.mxu0
        %802 = vmatprep.mubr.f32.mxu0 0.0
        %803 = vmatmul.mubr.f32.gmra.mxu0 %v619
        %v804 = vpop.f32.mrf.mxu0
        %v805 = vadd.f32 %v656, %v804
        %v806 = vpop.f32.mrf.mxu0
        %807 = vmatprep.mubr.f32.mxu0 0.0
        %808 = vmatmul.mubr.f32.gmra.mxu0 %v620
        %v809 = vpop.f32.mrf.mxu0
        %v810 = vadd.f32 %v656, %v809
        %v811 = vpop.f32.mrf.mxu0
        %812 = vmatprep.mubr.f32.mxu0 0.0
        %813 = vmatmul.mubr.f32.gmra.mxu0 %v621
        %v814 = vpop.f32.mrf.mxu0
        %v815 = vadd.f32 %v656, %v814
        %v816 = vpop.f32.mrf.mxu0
        %817 = vmatprep.mubr.f32.mxu0 0.0
        %818 = vmatmul.mubr.f32.gmra.mxu0 %v622
        %v819 = vpop.f32.mrf.mxu0
        %v820 = vadd.f32 %v656, %v819
        %v821 = vpop.f32.mrf.mxu0
        %822 = vmatprep.mubr.f32.mxu0 0.0
        %823 = vmatmul.mubr.f32.gmra.mxu0 %v623
        %v824 = vpop.f32.mrf.mxu0
        %v825 = vadd.f32 %v656, %v824
        %v826 = vpop.f32.mrf.mxu0
        %827 = vmatprep.mubr.f32.mxu0 0.0
        %828 = vmatmul.mubr.f32.gmra.mxu0 %v624
        %v829 = vpop.f32.mrf.mxu0
        %v830 = vadd.f32 %v656, %v829
        %v831 = vpop.f32.mrf.mxu0
        %832 = vmatprep.mubr.f32.mxu0 0.0
        %833 = vmatmul.mubr.f32.gmra.mxu0 %v625
        %v834 = vpop.f32.mrf.mxu0
        %v835 = vadd.f32 %v656, %v834
        %v836 = vpop.f32.mrf.mxu0
        %837 = vmatprep.mubr.f32.mxu0 0.0
        %838 = vmatmul.mubr.f32.gmra.mxu0 %v626
        %v839 = vpop.f32.mrf.mxu0
        %v840 = vadd.f32 %v656, %v839
        %v841 = vpop.f32.mrf.mxu0
        %842 = vmatprep.mubr.f32.mxu0 0.0
        %843 = vmatmul.mubr.f32.gmra.mxu0 %v627
        %v844 = vpop.f32.mrf.mxu0
        %v845 = vadd.f32 %v656, %v844
        %v846 = vpop.f32.mrf.mxu0
        %847 = vmatprep.mubr.f32.mxu0 0.0
        %848 = vmatmul.mubr.f32.gmra.mxu0 %v628
        %v849 = vpop.f32.mrf.mxu0
        %v850 = vadd.f32 %v656, %v849
        %v851 = vpop.f32.mrf.mxu0
        %852 = vmatprep.mubr.f32.mxu0 0.0
        %853 = vmatmul.mubr.f32.gmra.mxu0 %v629
        %v854 = vpop.f32.mrf.mxu0
        %v855 = vadd.f32 %v656, %v854
        %v856 = vpop.f32.mrf.mxu0
        %857 = vmatprep.mubr.f32.mxu0 0.0
        %858 = vmatmul.mubr.f32.gmra.mxu0 %v630
        %v859 = vpop.f32.mrf.mxu0
        %v860 = vadd.f32 %v656, %v859
        %v861 = vpop.f32.mrf.mxu0
        %862 = vmatprep.mubr.f32.mxu0 0.0
        %863 = vmatmul.mubr.f32.gmra.mxu0 %v631
        %v864 = vpop.f32.mrf.mxu0
        %v865 = vadd.f32 %v656, %v864
        %v866 = vpop.f32.mrf.mxu0
        %867 = vmatprep.mubr.f32.mxu0 0.0
        %868 = vmatmul.mubr.f32.gmra.mxu0 %v632
        %v869 = vpop.f32.mrf.mxu0
        %v870 = vadd.f32 %v656, %v869
        %v871 = vpop.f32.mrf.mxu0
        %872 = vmatprep.mubr.f32.mxu0 0.0
        %873 = vmatmul.mubr.f32.gmra.mxu0 %v633
        %v874 = vpop.f32.mrf.mxu0
        %v875 = vadd.f32 %v656, %v874
        %v876 = vpop.f32.mrf.mxu0
        %877 = vmatprep.mubr.f32.mxu0 0.0
        %878 = vmatmul.mubr.f32.gmra.mxu0 %v634
        %v879 = vpop.f32.mrf.mxu0
        %v880 = vadd.f32 %v656, %v879
        %v881 = vpop.f32.mrf.mxu0
        %882 = vdwg.mxu0
        %883 = vst [vmem:[%s272] sm:$0xff] %v725
        %884 = vst [vmem:[%s272 + $0x8] sm:$0xff] %v730
        %885 = vst [vmem:[%s272 + $0x10] sm:$0xff] %v735
        %886 = vst [vmem:[%s272 + $0x18] sm:$0xff] %v740
        %887 = vst [vmem:[%s272 + $0x20] sm:$0xff] %v745
        %888 = vst [vmem:[%s272 + $0x28] sm:$0xff] %v750
        %889 = vst [vmem:[%s272 + $0x30] sm:$0xff] %v755
        %890 = vst [vmem:[%s272 + $0x38] sm:$0xff] %v760
        %891 = vst [vmem:[%s272 + $0x40] sm:$0xff] %v765
        %892 = vst [vmem:[%s272 + $0x48] sm:$0xff] %v770
        %893 = vst [vmem:[%s272 + $0x50] sm:$0xff] %v775
        %894 = vst [vmem:[%s272 + $0x58] sm:$0xff] %v780
        %895 = vst [vmem:[%s272 + $0x60] sm:$0xff] %v785
        %896 = vst [vmem:[%s272 + $0x68] sm:$0xff] %v790
        %897 = vst [vmem:[%s272 + $0x70] sm:$0xff] %v795
        %898 = vst [vmem:[%s272 + $0x78] sm:$0xff] %v800
        %899 = vst [vmem:[%s272 + $0x80] sm:$0xff] %v805
        %900 = vst [vmem:[%s272 + $0x88] sm:$0xff] %v810
        %901 = vst [vmem:[%s272 + $0x90] sm:$0xff] %v815
        %902 = vst [vmem:[%s272 + $0x98] sm:$0xff] %v820
        %903 = vst [vmem:[%s272 + $0xa0] sm:$0xff] %v825
        %904 = vst [vmem:[%s272 + $0xa8] sm:$0xff] %v830
        %905 = vst [vmem:[%s272 + $0xb0] sm:$0xff] %v835
        %906 = vst [vmem:[%s272 + $0xb8] sm:$0xff] %v840
        %907 = vst [vmem:[%s272 + $0xc0] sm:$0xff] %v845
        %908 = vst [vmem:[%s272 + $0xc8] sm:$0xff] %v850
        %909 = vst [vmem:[%s272 + $0xd0] sm:$0xff] %v855
        %910 = vst [vmem:[%s272 + $0xd8] sm:$0xff] %v860
        %911 = vst [vmem:[%s272 + $0xe0] sm:$0xff] %v865
        %912 = vst [vmem:[%s272 + $0xe8] sm:$0xff] %v870
        %913 = vst [vmem:[%s272 + $0xf0] sm:$0xff] %v875
        %914 = vst [vmem:[%s272 + $0xf8] sm:$0xff] %v880
        %s915 = sand.u32 %s141, 1
        %s916 = scalar_lea.sflag [#allocation4], %s915
        %s917 = sand.u32 %s141, 1
        %s918 = smul.addr %s917, 256
        %s919 = scalar_lea.vmem [#allocation8], %s918
        // Predicated region
        $region53: #{tpu_custom_call.1} parent=39 // pred_check
          %p920 = pneg %p151
        $region54: #{tpu_custom_call.1} parent=39 // pred_check_branch
          %922 = sbr.rel (%p920) target = $region56
        $region55: #{tpu_custom_call.1} parent=39 // pred_region
          %s923 = smul.u32 32, %s23
          %s925 = ssub.s32 4096, 4096
          %926 = vsyncadd %s916, %s925
          %s927 = smul.addr %s923, 128
          %s928 = scalar_lea.hbm %s5, %s927
          %s929 = sshll.u32 %s919, 4
          %s930 = int_to_ptr.vmem [resolvable:$true] %s929
          %935 = dma.vmem_to_hbm [thread:$0]  %s930, 4096, %s928, %s916, 128, 128, 8
        $region56: #{tpu_custom_call.1} parent=39 // pred_fallthru
          _
      $region40: #{tpu_custom_call.1} parent=5 // pred_fallthru
        _
      %p936 = scmp.le.s32.totalorder 2, %s18
      // Predicated region
      $region57: #{tpu_custom_call.1} parent=5 // pred_check
        %p937 = pneg %p936
      $region58: #{tpu_custom_call.1} parent=5 // pred_check_branch
        %939 = sbr.rel (%p937) target = $region60
      $region59: #{tpu_custom_call.1} parent=5 // pred_region
        %s940 = ssub.s32 %s18, 2
        // Predicated region
        $region61: #{tpu_custom_call.1} parent=59 // pred_check
          %p941 = pneg %p157
        $region62: #{tpu_custom_call.1} parent=59 // pred_check_branch
          %943 = sbr.rel (%p941) target = $region64
        $region63: #{tpu_custom_call.1} parent=59 // pred_region
          %s944 = sand.u32 %s142, 1
          %s945 = scalar_lea.sflag [#allocation4], %s944
          %s946 = sand.u32 %s142, 1
          %s947 = smul.addr %s946, 256
          %s948 = scalar_lea.vmem [#allocation8], %s947
          %949 = dma.done %s945, 4096
        $region64: #{tpu_custom_call.1} parent=59 // pred_fallthru
          _
      $region60: #{tpu_custom_call.1} parent=5 // pred_fallthru
        _
    $region6: #{tpu_custom_call.1} parent=1 // loop_footer
      %s22 = sadd.s32 1, %s18
    $region7: #{tpu_custom_call.1} parent=1 // loop_footer_branch
      %17 = sbr.rel target = $region3
    $region8: #{tpu_custom_call.1} parent=1 // loop_exit
      _
    %950 = vsyncpa [#allocation3], 1
    %s951 = scalar_lea.sflag [#allocation3], 1
    %952 = vsyncpa %s951, 1
    %953 = vsyncpa [#allocation6], 1
    %954 = vsyncpa [#allocation4], 1
    %s955 = scalar_lea.sflag [#allocation4], 1
    %956 = vsyncpa %s955, 1

// kernel: tpu_custom_call.1
$region0: #{tpu_custom_call.1}
  #allocation0 [shape = 'u32[]', space=smem, size = 0x4, offset = 0x4, fixed_abs, tag = 'smem constant byte address 0x4 - core index']
  #allocation1 [shape = 'u32[144,128]{1,0:T(1,128)}', space=vmem, size = 0x12000, scoped, tag = 'internal scratch']
  %s0 = inlined_call_operand.hbm [shape: f32[512,256], index: 0, kind: input, shape index: {}]
  %s1 = inlined_call_operand.hbm [shape: f32[256,128], index: 1, kind: input, shape index: {}]
  %s2 = inlined_call_operand.vmem [shape: f32[1,128], index: 2, kind: input, shape index: {}]
  %s3 = inlined_call_operand.hbm [shape: f32[128,128], index: 3, kind: input, shape index: {}]
  %s4 = inlined_call_operand.vmem [shape: f32[1,128], index: 4, kind: input, shape index: {}]
  %s5 = inlined_call_operand.hbm [shape: f32[512,128], index: 5, kind: output, shape index: {}]
  %s6 = sld [smem:[#allocation0]]
  $region65: #{tpu_custom_call.1} parent=0
    _
  %s8 = ssub.s32 1, %s6
  %s9 = scalar_select 0, %s8, %s6
  $region1: #{tpu_custom_call.1} parent=0
    #allocation2 [shape = 'u8[524288]{0}', space=vmem, size = 0x80000, scoped, tag = 'input window, operand 0']
    #allocation3 [shape = 's32[2]{0}', space=sflag, size = 0x8, scoped, tag = 'scoped memory for tpu_custom_call.1']
    #allocation4 [shape = 's32[2]{0}', space=sflag, size = 0x8, scoped, tag = 'scoped memory for tpu_custom_call.1']
    #allocation5 [shape = 'u8[131072]{0}', space=vmem, size = 0x20000, scoped, tag = 'input window, operand 1, single buffered']
    #allocation6 [shape = 's32[1]{0}', space=sflag, size = 0x4, scoped, tag = 'scoped memory for tpu_custom_call.1']
    #allocation7 [shape = 'u8[65536]{0}', space=vmem, size = 0x10000, scoped, tag = 'input window, operand 3, single buffered']
    #allocation8 [shape = 'u8[262144]{0}', space=vmem, size = 0x40000, scoped, tag = 'output window, operand 0']
    %10 = vsyncpa [#allocation3], 0
    %s11 = scalar_lea.sflag [#allocation3], 1
    %12 = vsyncpa %s11, 0
    %13 = vsyncpa [#allocation6], 0
    %14 = vsyncpa [#allocation4], 0
    %s15 = scalar_lea.sflag [#allocation4], 1
    %16 = vsyncpa %s15, 0
    loop: start=0, step=1, limit=4
    $region2: #{tpu_custom_call.1} parent=1 // loop_pre_header
      _
    $region3: #{tpu_custom_call.1} parent=1 // loop_header
      %s18 = sphi 0, %s22
      %p19 = scmp.ge.s32.totalorder %s18, 4
      %s28 = sphi 0, %s30
      %s31 = sphi 0, %s28
      %s32 = sphi 0, %s31
      %s48 = sphi 0, %s32
      %s52 = sphi 0, %s52
      %s54 = sphi 0, %s52
      %s55 = sphi 0, %s54
      %s69 = sphi 0, %s55
      %s73 = sphi 0, %s73
      %s75 = sphi 0, %s73
      %s76 = sphi 0, %s75
      %s90 = sphi 0, %s76
      %s94 = sphi 0, %s94
      %s96 = sphi 0, %s94
      %s97 = sphi 0, %s96
      %s111 = sphi 0, %s97
      %s115 = sphi 0, %s115
      %s117 = sphi 0, %s115
      %s118 = sphi 0, %s117
      %s132 = sphi 0, %s118
      %s138 = sphi 0, %s140
      %s141 = sphi 0, %s138
      %s142 = sphi 0, %s141
      %s158 = sphi 0, %s142
    $region4: #{tpu_custom_call.1} parent=1 // loop_header_branch
      %21 = sbr.rel (%p19) target = $region8
    $region5: #{tpu_custom_call.1} parent=1 // loop_body
      %s23 = ssub.s32 %s18, 1
      %s24 = ssub.s32 %s18, 2
      %s25 = sadd.s32 %s18, 1
      %s26 = ssub.s32 %s18, %s25
      %p27 = scmp.eq.s32.totalorder %s26, 0
      %s29 = sadd.s32 %s28, 1
      %s30 = scalar_select %p27, %s28, %s29
      %p33 = pneg %p27
      %p34 = scmp.eq.s32.totalorder %s18, 1
      %p35 = por %p33, %p34
      %p36 = scmp.ne.s32.totalorder %s28, %s31
      %p37 = scmp.eq.s32.totalorder %s18, 0
      %p38 = por %p36, %p37
      %p39 = scmp.ne.s32.totalorder %s28, %s31
      %p40 = scmp.eq.s32.totalorder %s23, 1
      %p41 = por %p39, %p40
      %p42 = scmp.ne.s32.totalorder %s31, %s32
      %p43 = scmp.eq.s32.totalorder %s23, 0
      %p44 = por %p42, %p43
      %p45 = scmp.ne.s32.totalorder %s31, %s32
      %p46 = scmp.eq.s32.totalorder %s24, 1
      %p47 = por %p45, %p46
      %p49 = scmp.ne.s32.totalorder %s32, %s48
      %p50 = scmp.eq.s32.totalorder %s24, 0
      %p51 = por %p49, %p50
      %s53 = sadd.s32 %s52, 1
      %p56 = scmp.eq.s32.totalorder %s18, 1
      %p57 = scmp.ne.s32.totalorder %s52, %s54
      %p58 = scmp.eq.s32.totalorder %s18, 0
      %p59 = por %p57, %p58
      %p60 = scmp.ne.s32.totalorder %s52, %s54
      %p61 = scmp.eq.s32.totalorder %s23, 1
      %p62 = por %p60, %p61
      %p63 = scmp.ne.s32.totalorder %s54, %s55
      %p64 = scmp.eq.s32.totalorder %s23, 0
      %p65 = por %p63, %p64
      %p66 = scmp.ne.s32.totalorder %s54, %s55
      %p67 = scmp.eq.s32.totalorder %s24, 1
      %p68 = por %p66, %p67
      %p70 = scmp.ne.s32.totalorder %s55, %s69
      %p71 = scmp.eq.s32.totalorder %s24, 0
      %p72 = por %p70, %p71
      %s74 = sadd.s32 %s73, 1
      %p77 = scmp.eq.s32.totalorder %s18, 1
      %p78 = scmp.ne.s32.totalorder %s73, %s75
      %p79 = scmp.eq.s32.totalorder %s18, 0
      %p80 = por %p78, %p79
      %p81 = scmp.ne.s32.totalorder %s73, %s75
      %p82 = scmp.eq.s32.totalorder %s23, 1
      %p83 = por %p81, %p82
      %p84 = scmp.ne.s32.totalorder %s75, %s76
      %p85 = scmp.eq.s32.totalorder %s23, 0
      %p86 = por %p84, %p85
      %p87 = scmp.ne.s32.totalorder %s75, %s76
      %p88 = scmp.eq.s32.totalorder %s24, 1
      %p89 = por %p87, %p88
      %p91 = scmp.ne.s32.totalorder %s76, %s90
      %p92 = scmp.eq.s32.totalorder %s24, 0
      %p93 = por %p91, %p92
      %s95 = sadd.s32 %s94, 1
      %p98 = scmp.eq.s32.totalorder %s18, 1
      %p99 = scmp.ne.s32.totalorder %s94, %s96
      %p100 = scmp.eq.s32.totalorder %s18, 0
      %p101 = por %p99, %p100
      %p102 = scmp.ne.s32.totalorder %s94, %s96
      %p103 = scmp.eq.s32.totalorder %s23, 1
      %p104 = por %p102, %p103
      %p105 = scmp.ne.s32.totalorder %s96, %s97
      %p106 = scmp.eq.s32.totalorder %s23, 0
      %p107 = por %p105, %p106
      %p108 = scmp.ne.s32.totalorder %s96, %s97
      %p109 = scmp.eq.s32.totalorder %s24, 1
      %p110 = por %p108, %p109
      %p112 = scmp.ne.s32.totalorder %s97, %s111
      %p113 = scmp.eq.s32.totalorder %s24, 0
      %p114 = por %p112, %p113
      %s116 = sadd.s32 %s115, 1
      %p119 = scmp.eq.s32.totalorder %s18, 1
      %p120 = scmp.ne.s32.totalorder %s115, %s117
      %p121 = scmp.eq.s32.totalorder %s18, 0
      %p122 = por %p120, %p121
      %p123 = scmp.ne.s32.totalorder %s115, %s117
      %p124 = scmp.eq.s32.totalorder %s23, 1
      %p125 = por %p123, %p124
      %p126 = scmp.ne.s32.totalorder %s117, %s118
      %p127 = scmp.eq.s32.totalorder %s23, 0
      %p128 = por %p126, %p127
      %p129 = scmp.ne.s32.totalorder %s117, %s118
      %p130 = scmp.eq.s32.totalorder %s24, 1
      %p131 = por %p129, %p130
      %p133 = scmp.ne.s32.totalorder %s118, %s132
      %p134 = scmp.eq.s32.totalorder %s24, 0
      %p135 = por %p133, %p134
      %s136 = ssub.s32 %s18, %s25
      %p137 = scmp.eq.s32.totalorder %s136, 0
      %s139 = sadd.s32 %s138, 1
      %s140 = scalar_select %p137, %s138, %s139
      %p143 = pneg %p137
      %p144 = scmp.eq.s32.totalorder %s18, 1
      %p145 = por %p143, %p144
      %p146 = scmp.ne.s32.totalorder %s138, %s141
      %p147 = scmp.eq.s32.totalorder %s18, 0
      %p148 = por %p146, %p147
      %p149 = scmp.ne.s32.totalorder %s138, %s141
      %p150 = scmp.eq.s32.totalorder %s23, 1
      %p151 = por %p149, %p150
      %p152 = scmp.ne.s32.totalorder %s141, %s142
      %p153 = scmp.eq.s32.totalorder %s23, 0
      %p154 = por %p152, %p153
      %p155 = scmp.ne.s32.totalorder %s141, %s142
      %p156 = scmp.eq.s32.totalorder %s24, 1
      %p157 = por %p155, %p156
      %p159 = scmp.ne.s32.totalorder %s142, %s158
      %p160 = scmp.eq.s32.totalorder %s24, 0
      %p161 = por %p159, %p160
      %p162 = scmp.le.s32.totalorder 1, %s18
      %p163 = scmp.lt.s32.totalorder %s18, 3
      %p164 = pnand %p162, %p163
      %p165 = pneg %p164
      // Predicated region
      $region9: #{tpu_custom_call.1} parent=5 // pred_check
        _
      $region10: #{tpu_custom_call.1} parent=5 // pred_check_branch
        %167 = sbr.rel (%p164) target = $region12
      $region11: #{tpu_custom_call.1} parent=5 // pred_region
        %s168 = ssub.s32 %s18, 1
        // Predicated region
        $region13: #{tpu_custom_call.1} parent=11 // pred_check
          %p169 = pneg %p65
        $region14: #{tpu_custom_call.1} parent=11 // pred_check_branch
          %171 = sbr.rel (%p169) target = $region16
        $region15: #{tpu_custom_call.1} parent=11 // pred_region
          %s173 = ssub.s32 4096, 4096
          %174 = vsyncadd [#allocation6], %s173
          %s175 = sshll.u32 [#allocation5], 4
          %s176 = int_to_ptr.vmem [resolvable:$true] %s175
          %181 = dma.hbm_to_vmem [thread:$0]  %s1, 4096, %s176, [#allocation6], 128, 128, 8
        $region16: #{tpu_custom_call.1} parent=11 // pred_fallthru
          _
        // Predicated region
        $region17: #{tpu_custom_call.1} parent=11 // pred_check
          %p182 = pneg %p86
        $region18: #{tpu_custom_call.1} parent=11 // pred_check_branch
          %184 = sbr.rel (%p182) target = $region20
        $region19: #{tpu_custom_call.1} parent=11 // pred_region
          _
        $region20: #{tpu_custom_call.1} parent=11 // pred_fallthru
          _
        // Predicated region
        $region21: #{tpu_custom_call.1} parent=11 // pred_check
          %p185 = pneg %p107
        $region22: #{tpu_custom_call.1} parent=11 // pred_check_branch
          %187 = sbr.rel (%p185) target = $region24
        $region23: #{tpu_custom_call.1} parent=11 // pred_region
          %s189 = ssub.s32 2048, 2048
          %190 = vsyncadd [#allocation6], %s189
          %s191 = sshll.u32 [#allocation7], 4
          %s192 = int_to_ptr.vmem [resolvable:$true] %s191
          %197 = dma.hbm_to_vmem [thread:$0]  %s3, 2048, %s192, [#allocation6], 128, 128, 8
        $region24: #{tpu_custom_call.1} parent=11 // pred_fallthru
          _
        // Predicated region
        $region25: #{tpu_custom_call.1} parent=11 // pred_check
          %p198 = pneg %p128
        $region26: #{tpu_custom_call.1} parent=11 // pred_check_branch
          %200 = sbr.rel (%p198) target = $region28
        $region27: #{tpu_custom_call.1} parent=11 // pred_region
          _
        $region28: #{tpu_custom_call.1} parent=11 // pred_fallthru
          _
      $region12: #{tpu_custom_call.1} parent=5 // pred_fallthru
        _
      %p201 = scmp.lt.s32.totalorder %s18, 2
      // Predicated region
      $region29: #{tpu_custom_call.1} parent=5 // pred_check
        %p202 = pneg %p201
      $region30: #{tpu_custom_call.1} parent=5 // pred_check_branch
        %204 = sbr.rel (%p202) target = $region32
      $region31: #{tpu_custom_call.1} parent=5 // pred_region
        // Predicated region
        $region33: #{tpu_custom_call.1} parent=31 // pred_check
          %p205 = pneg %p38
        $region34: #{tpu_custom_call.1} parent=31 // pred_check_branch
          %207 = sbr.rel (%p205) target = $region36
        $region35: #{tpu_custom_call.1} parent=31 // pred_region
          %s208 = sand.u32 %s28, 1
          %s209 = scalar_lea.sflag [#allocation3], %s208
          %s210 = sand.u32 %s28, 1
          %s211 = smul.addr %s210, 512
          %s212 = scalar_lea.vmem [#allocation2], %s211
          %s213 = smul.u32 32, %s18
          %s215 = ssub.s32 8192, 8192
          %216 = vsyncadd %s209, %s215
          %s217 = smul.addr %s213, 2
          %s218 = smul.addr %s217, 128
          %s219 = scalar_lea.hbm %s0, %s218
          %s220 = sshll.u32 %s212, 4
          %s221 = int_to_ptr.vmem [resolvable:$true] %s220
          %226 = dma.hbm_to_vmem [thread:$0]  %s219, 8192, %s221, %s209, 256, 256, 16
        $region36: #{tpu_custom_call.1} parent=31 // pred_fallthru
          _
      $region32: #{tpu_custom_call.1} parent=5 // pred_fallthru
        _
      %p227 = scmp.le.s32.totalorder 1, %s18
      %p228 = scmp.lt.s32.totalorder %s18, 3
      %p229 = pnand %p227, %p228
      %p230 = pneg %p229
      // Predicated region
      $region37: #{tpu_custom_call.1} parent=5 // pred_check
        _
      $region38: #{tpu_custom_call.1} parent=5 // pred_check_branch
        %232 = sbr.rel (%p229) target = $region40
      $region39: #{tpu_custom_call.1} parent=5 // pred_region
        %s233 = ssub.s32 %s18, 1
        %s234 = sand.u32 %s31, 1
        %s235 = scalar_lea.sflag [#allocation3], %s234
        %s236 = sand.u32 %s31, 1
        %s237 = smul.addr %s236, 512
        %s238 = scalar_lea.vmem [#allocation2], %s237
        // Predicated region
        $region41: #{tpu_custom_call.1} parent=39 // pred_check
          %p239 = pneg %p44
        $region42: #{tpu_custom_call.1} parent=39 // pred_check_branch
          %241 = sbr.rel (%p239) target = $region44
        $region43: #{tpu_custom_call.1} parent=39 // pred_region
          %242 = dma.done %s235, 8192
        $region44: #{tpu_custom_call.1} parent=39 // pred_fallthru
          _
        // Predicated region
        $region45: #{tpu_custom_call.1} parent=39 // pred_check
          %p243 = pneg %p65
        $region46: #{tpu_custom_call.1} parent=39 // pred_check_branch
          %245 = sbr.rel (%p243) target = $region48
        $region47: #{tpu_custom_call.1} parent=39 // pred_region
          %246 = dma.done [#allocation6], 4096
        $region48: #{tpu_custom_call.1} parent=39 // pred_fallthru
          _
        // Predicated region
        $region49: #{tpu_custom_call.1} parent=39 // pred_check
          %p247 = pneg %p107
        $region50: #{tpu_custom_call.1} parent=39 // pred_check_branch
          %249 = sbr.rel (%p247) target = $region52
        $region51: #{tpu_custom_call.1} parent=39 // pred_region
          %250 = dma.done [#allocation6], 2048
        $region52: #{tpu_custom_call.1} parent=39 // pred_fallthru
          _
        %s251 = sand.u32 %s31, 1
        %s252 = scalar_lea.sflag [#allocation3], %s251
        %s253 = sand.u32 %s31, 1
        %s254 = smul.addr %s253, 512
        %s255 = scalar_lea.vmem [#allocation2], %s254
        %p256 = pneg %p44
        %p257 = pneg %p41
        %p258 = pneg %p65
        %p259 = pneg %p62
        %p260 = pneg %p86
        %p261 = pneg %p83
        %p262 = pneg %p107
        %p263 = pneg %p104
        %p264 = pneg %p128
        %p265 = pneg %p125
        %p266 = pneg %p154
        %p267 = pneg %p151
        %s268 = sand.u32 %s141, 1
        %s269 = scalar_lea.sflag [#allocation4], %s268
        %s270 = sand.u32 %s141, 1
        %s271 = smul.addr %s270, 256
        %s272 = scalar_lea.vmem [#allocation8], %s271
        %s273 = smul.u32 32, %s23
        %s274 = smul.u32 32, %s23
        %v275 = vld [vmem:[%s238] sm:$0xff]
        %v276 = vld [vmem:[%s238 + $0x8] sm:$0xff]
        %v277 = vld [vmem:[%s238 + $0x10] sm:$0xff]
        %v278 = vld [vmem:[%s238 + $0x18] sm:$0xff]
        %v279 = vld [vmem:[%s238 + $0x20] sm:$0xff]
        %v280 = vld [vmem:[%s238 + $0x28] sm:$0xff]
        %v281 = vld [vmem:[%s238 + $0x30] sm:$0xff]
        %v282 = vld [vmem:[%s238 + $0x38] sm:$0xff]
        %v283 = vld [vmem:[%s238 + $0x40] sm:$0xff]
        %v284 = vld [vmem:[%s238 + $0x48] sm:$0xff]
        %v285 = vld [vmem:[%s238 + $0x50] sm:$0xff]
        %v286 = vld [vmem:[%s238 + $0x58] sm:$0xff]
        %v287 = vld [vmem:[%s238 + $0x60] sm:$0xff]
        %v288 = vld [vmem:[%s238 + $0x68] sm:$0xff]
        %v289 = vld [vmem:[%s238 + $0x70] sm:$0xff]
        %v290 = vld [vmem:[%s238 + $0x78] sm:$0xff]
        %v291 = vld [vmem:[%s238 + $0x80] sm:$0xff]
        %v292 = vld [vmem:[%s238 + $0x88] sm:$0xff]
        %v293 = vld [vmem:[%s238 + $0x90] sm:$0xff]
        %v294 = vld [vmem:[%s238 + $0x98] sm:$0xff]
        %v295 = vld [vmem:[%s238 + $0xa0] sm:$0xff]
        %v296 = vld [vmem:[%s238 + $0xa8] sm:$0xff]
        %v297 = vld [vmem:[%s238 + $0xb0] sm:$0xff]
        %v298 = vld [vmem:[%s238 + $0xb8] sm:$0xff]
        %v299 = vld [vmem:[%s238 + $0xc0] sm:$0xff]
        %v300 = vld [vmem:[%s238 + $0xc8] sm:$0xff]
        %v301 = vld [vmem:[%s238 + $0xd0] sm:$0xff]
        %v302 = vld [vmem:[%s238 + $0xd8] sm:$0xff]
        %v303 = vld [vmem:[%s238 + $0xe0] sm:$0xff]
        %v304 = vld [vmem:[%s238 + $0xe8] sm:$0xff]
        %v305 = vld [vmem:[%s238 + $0xf0] sm:$0xff]
        %v306 = vld [vmem:[%s238 + $0xf8] sm:$0xff]
        %v307 = vld [vmem:[%s238 + $0x100] sm:$0xff]
        %v308 = vld [vmem:[%s238 + $0x108] sm:$0xff]
        %v309 = vld [vmem:[%s238 + $0x110] sm:$0xff]
        %v310 = vld [vmem:[%s238 + $0x118] sm:$0xff]
        %v311 = vld [vmem:[%s238 + $0x120] sm:$0xff]
        %v312 = vld [vmem:[%s238 + $0x128] sm:$0xff]
        %v313 = vld [vmem:[%s238 + $0x130] sm:$0xff]
        %v314 = vld [vmem:[%s238 + $0x138] sm:$0xff]
        %v315 = vld [vmem:[%s238 + $0x140] sm:$0xff]
        %v316 = vld [vmem:[%s238 + $0x148] sm:$0xff]
        %v317 = vld [vmem:[%s238 + $0x150] sm:$0xff]
        %v318 = vld [vmem:[%s238 + $0x158] sm:$0xff]
        %v319 = vld [vmem:[%s238 + $0x160] sm:$0xff]
        %v320 = vld [vmem:[%s238 + $0x168] sm:$0xff]
        %v321 = vld [vmem:[%s238 + $0x170] sm:$0xff]
        %v322 = vld [vmem:[%s238 + $0x178] sm:$0xff]
        %v323 = vld [vmem:[%s238 + $0x180] sm:$0xff]
        %v324 = vld [vmem:[%s238 + $0x188] sm:$0xff]
        %v325 = vld [vmem:[%s238 + $0x190] sm:$0xff]
        %v326 = vld [vmem:[%s238 + $0x198] sm:$0xff]
        %v327 = vld [vmem:[%s238 + $0x1a0] sm:$0xff]
        %v328 = vld [vmem:[%s238 + $0x1a8] sm:$0xff]
        %v329 = vld [vmem:[%s238 + $0x1b0] sm:$0xff]
        %v330 = vld [vmem:[%s238 + $0x1b8] sm:$0xff]
        %v331 = vld [vmem:[%s238 + $0x1c0] sm:$0xff]
        %v332 = vld [vmem:[%s238 + $0x1c8] sm:$0xff]
        %v333 = vld [vmem:[%s238 + $0x1d0] sm:$0xff]
        %v334 = vld [vmem:[%s238 + $0x1d8] sm:$0xff]
        %v335 = vld [vmem:[%s238 + $0x1e0] sm:$0xff]
        %v336 = vld [vmem:[%s238 + $0x1e8] sm:$0xff]
        %v337 = vld [vmem:[%s238 + $0x1f0] sm:$0xff]
        %v338 = vld [vmem:[%s238 + $0x1f8] sm:$0xff]
        %v339 = vld [vmem:[#allocation5] sm:$0xff]
        %v340 = vld [vmem:[#allocation5 + $0x8] sm:$0xff]
        %v341 = vld [vmem:[#allocation5 + $0x10] sm:$0xff]
        %v342 = vld [vmem:[#allocation5 + $0x18] sm:$0xff]
        %v343 = vld [vmem:[#allocation5 + $0x20] sm:$0xff]
        %v344 = vld [vmem:[#allocation5 + $0x28] sm:$0xff]
        %v345 = vld [vmem:[#allocation5 + $0x30] sm:$0xff]
        %v346 = vld [vmem:[#allocation5 + $0x38] sm:$0xff]
        %v347 = vld [vmem:[#allocation5 + $0x40] sm:$0xff]
        %v348 = vld [vmem:[#allocation5 + $0x48] sm:$0xff]
        %v349 = vld [vmem:[#allocation5 + $0x50] sm:$0xff]
        %v350 = vld [vmem:[#allocation5 + $0x58] sm:$0xff]
        %v351 = vld [vmem:[#allocation5 + $0x60] sm:$0xff]
        %v352 = vld [vmem:[#allocation5 + $0x68] sm:$0xff]
        %v353 = vld [vmem:[#allocation5 + $0x70] sm:$0xff]
        %v354 = vld [vmem:[#allocation5 + $0x78] sm:$0xff]
        %v355 = vld [vmem:[#allocation5 + $0x80] sm:$0xff]
        %v356 = vld [vmem:[#allocation5 + $0x88] sm:$0xff]
        %v357 = vld [vmem:[#allocation5 + $0x90] sm:$0xff]
        %v358 = vld [vmem:[#allocation5 + $0x98] sm:$0xff]
        %v359 = vld [vmem:[#allocation5 + $0xa0] sm:$0xff]
        %v360 = vld [vmem:[#allocation5 + $0xa8] sm:$0xff]
        %v361 = vld [vmem:[#allocation5 + $0xb0] sm:$0xff]
        %v362 = vld [vmem:[#allocation5 + $0xb8] sm:$0xff]
        %v363 = vld [vmem:[#allocation5 + $0xc0] sm:$0xff]
        %v364 = vld [vmem:[#allocation5 + $0xc8] sm:$0xff]
        %v365 = vld [vmem:[#allocation5 + $0xd0] sm:$0xff]
        %v366 = vld [vmem:[#allocation5 + $0xd8] sm:$0xff]
        %v367 = vld [vmem:[#allocation5 + $0xe0] sm:$0xff]
        %v368 = vld [vmem:[#allocation5 + $0xe8] sm:$0xff]
        %v369 = vld [vmem:[#allocation5 + $0xf0] sm:$0xff]
        %v370 = vld [vmem:[#allocation5 + $0xf8] sm:$0xff]
        %v371 = vld [vmem:[%s2] sm:$0x1]
        %v373 = vlaneseq
        %v374 = vshrl.u32 %v373, 7
        %v375 = vsub.s32 0, %v374
        %v376 = vrot.slane %v371, %v375
        %378 = vmatprep.subr.mxu0 0.0
        %379 = vmatpush1.msra.mxu0 %v354
        %380 = vmatprep.subr.mxu0 0.0
        %381 = vmatpush1.msra.mxu0 %v353
        %382 = vmatprep.subr.mxu0 0.0
        %383 = vmatpush1.msra.mxu0 %v352
        %384 = vmatprep.subr.mxu0 0.0
        %385 = vmatpush1.msra.mxu0 %v351
        %386 = vmatprep.subr.mxu0 0.0
        %387 = vmatpush1.msra.mxu0 %v350
        %388 = vmatprep.subr.mxu0 0.0
        %389 = vmatpush1.msra.mxu0 %v349
        %390 = vmatprep.subr.mxu0 0.0
        %391 = vmatpush1.msra.mxu0 %v348
        %392 = vmatprep.subr.mxu0 0.0
        %393 = vmatpush1.msra.mxu0 %v347
        %394 = vmatprep.subr.mxu0 0.0
        %395 = vmatpush1.msra.mxu0 %v346
        %396 = vmatprep.subr.mxu0 0.0
        %397 = vmatpush1.msra.mxu0 %v345
        %398 = vmatprep.subr.mxu0 0.0
        %399 = vmatpush1.msra.mxu0 %v344
        %400 = vmatprep.subr.mxu0 0.0
        %401 = vmatpush1.msra.mxu0 %v343
        %402 = vmatprep.subr.mxu0 0.0
        %403 = vmatpush1.msra.mxu0 %v342
        %404 = vmatprep.subr.mxu0 0.0
        %405 = vmatpush1.msra.mxu0 %v341
        %406 = vmatprep.subr.mxu0 0.0
        %407 = vmatpush1.msra.mxu0 %v340
        %408 = vmatprep.subr.mxu0 0.0
        %409 = vmatpush1.msra.mxu0 %v339
        %410 = vmatprep.subr.mxu0 0.0
        %411 = vmatpush2.msra.mxu0 %v370
        %412 = vmatprep.subr.mxu0 0.0
        %413 = vmatpush2.msra.mxu0 %v369
        %414 = vmatprep.subr.mxu0 0.0
        %415 = vmatpush2.msra.mxu0 %v368
        %416 = vmatprep.subr.mxu0 0.0
        %417 = vmatpush2.msra.mxu0 %v367
        %418 = vmatprep.subr.mxu0 0.0
        %419 = vmatpush2.msra.mxu0 %v366
        %420 = vmatprep.subr.mxu0 0.0
        %421 = vmatpush2.msra.mxu0 %v365
        %422 = vmatprep.subr.mxu0 0.0
        %423 = vmatpush2.msra.mxu0 %v364
        %424 = vmatprep.subr.mxu0 0.0
        %425 = vmatpush2.msra.mxu0 %v363
        %426 = vmatprep.subr.mxu0 0.0
        %427 = vmatpush2.msra.mxu0 %v362
        %428 = vmatprep.subr.mxu0 0.0
        %429 = vmatpush2.msra.mxu0 %v361
        %430 = vmatprep.subr.mxu0 0.0
        %431 = vmatpush2.msra.mxu0 %v360
        %432 = vmatprep.subr.mxu0 0.0
        %433 = vmatpush2.msra.mxu0 %v359
        %434 = vmatprep.subr.mxu0 0.0
        %435 = vmatpush2.msra.mxu0 %v358
        %436 = vmatprep.subr.mxu0 0.0
        %437 = vmatpush2.msra.mxu0 %v357
        %438 = vmatprep.subr.mxu0 0.0
        %439 = vmatpush2.msra.mxu0 %v356
        %440 = vmatprep.subr.mxu0 0.0
        %441 = vmatpush2.msra.mxu0 %v355
        %442 = vmatprep.mubr.f32.mxu0 %v276
        %443 = vmatmul.mubr.f32.gmra.mxu0 %v275
        %v444 = vpop.f32.mrf.mxu0
        %v445 = vadd.f32 %v376, %v444
        %v446 = vpop.f32.mrf.mxu0
        %447 = vmatprep.mubr.f32.mxu0 %v278
        %448 = vmatmul.mubr.f32.gmra.mxu0 %v277
        %v449 = vpop.f32.mrf.mxu0
        %v450 = vadd.f32 %v376, %v449
        %v451 = vpop.f32.mrf.mxu0
        %452 = vmatprep.mubr.f32.mxu0 %v280
        %453 = vmatmul.mubr.f32.gmra.mxu0 %v279
        %v454 = vpop.f32.mrf.mxu0
        %v455 = vadd.f32 %v376, %v454
        %v456 = vpop.f32.mrf.mxu0
        %457 = vmatprep.mubr.f32.mxu0 %v282
        %458 = vmatmul.mubr.f32.gmra.mxu0 %v281
        %v459 = vpop.f32.mrf.mxu0
        %v460 = vadd.f32 %v376, %v459
        %v461 = vpop.f32.mrf.mxu0
        %462 = vmatprep.mubr.f32.mxu0 %v284
        %463 = vmatmul.mubr.f32.gmra.mxu0 %v283
        %v464 = vpop.f32.mrf.mxu0
        %v465 = vadd.f32 %v376, %v464
        %v466 = vpop.f32.mrf.mxu0
        %467 = vmatprep.mubr.f32.mxu0 %v286
        %468 = vmatmul.mubr.f32.gmra.mxu0 %v285
        %v469 = vpop.f32.mrf.mxu0
        %v470 = vadd.f32 %v376, %v469
        %v471 = vpop.f32.mrf.mxu0
        %472 = vmatprep.mubr.f32.mxu0 %v288
        %473 = vmatmul.mubr.f32.gmra.mxu0 %v287
        %v474 = vpop.f32.mrf.mxu0
        %v475 = vadd.f32 %v376, %v474
        %v476 = vpop.f32.mrf.mxu0
        %477 = vmatprep.mubr.f32.mxu0 %v290
        %478 = vmatmul.mubr.f32.gmra.mxu0 %v289
        %v479 = vpop.f32.mrf.mxu0
        %v480 = vadd.f32 %v376, %v479
        %v481 = vpop.f32.mrf.mxu0
        %482 = vmatprep.mubr.f32.mxu0 %v292
        %483 = vmatmul.mubr.f32.gmra.mxu0 %v291
        %v484 = vpop.f32.mrf.mxu0
        %v485 = vadd.f32 %v376, %v484
        %v486 = vpop.f32.mrf.mxu0
        %487 = vmatprep.mubr.f32.mxu0 %v294
        %488 = vmatmul.mubr.f32.gmra.mxu0 %v293
        %v489 = vpop.f32.mrf.mxu0
        %v490 = vadd.f32 %v376, %v489
        %v491 = vpop.f32.mrf.mxu0
        %492 = vmatprep.mubr.f32.mxu0 %v296
        %493 = vmatmul.mubr.f32.gmra.mxu0 %v295
        %v494 = vpop.f32.mrf.mxu0
        %v495 = vadd.f32 %v376, %v494
        %v496 = vpop.f32.mrf.mxu0
        %497 = vmatprep.mubr.f32.mxu0 %v298
        %498 = vmatmul.mubr.f32.gmra.mxu0 %v297
        %v499 = vpop.f32.mrf.mxu0
        %v500 = vadd.f32 %v376, %v499
        %v501 = vpop.f32.mrf.mxu0
        %502 = vmatprep.mubr.f32.mxu0 %v300
        %503 = vmatmul.mubr.f32.gmra.mxu0 %v299
        %v504 = vpop.f32.mrf.mxu0
        %v505 = vadd.f32 %v376, %v504
        %v506 = vpop.f32.mrf.mxu0
        %507 = vmatprep.mubr.f32.mxu0 %v302
        %508 = vmatmul.mubr.f32.gmra.mxu0 %v301
        %v509 = vpop.f32.mrf.mxu0
        %v510 = vadd.f32 %v376, %v509
        %v511 = vpop.f32.mrf.mxu0
        %512 = vmatprep.mubr.f32.mxu0 %v304
        %513 = vmatmul.mubr.f32.gmra.mxu0 %v303
        %v514 = vpop.f32.mrf.mxu0
        %v515 = vadd.f32 %v376, %v514
        %v516 = vpop.f32.mrf.mxu0
        %517 = vmatprep.mubr.f32.mxu0 %v306
        %518 = vmatmul.mubr.f32.gmra.mxu0 %v305
        %v519 = vpop.f32.mrf.mxu0
        %v520 = vadd.f32 %v376, %v519
        %v521 = vpop.f32.mrf.mxu0
        %522 = vmatprep.mubr.f32.mxu0 %v308
        %523 = vmatmul.mubr.f32.gmra.mxu0 %v307
        %v524 = vpop.f32.mrf.mxu0
        %v525 = vadd.f32 %v376, %v524
        %v526 = vpop.f32.mrf.mxu0
        %527 = vmatprep.mubr.f32.mxu0 %v310
        %528 = vmatmul.mubr.f32.gmra.mxu0 %v309
        %v529 = vpop.f32.mrf.mxu0
        %v530 = vadd.f32 %v376, %v529
        %v531 = vpop.f32.mrf.mxu0
        %532 = vmatprep.mubr.f32.mxu0 %v312
        %533 = vmatmul.mubr.f32.gmra.mxu0 %v311
        %v534 = vpop.f32.mrf.mxu0
        %v535 = vadd.f32 %v376, %v534
        %v536 = vpop.f32.mrf.mxu0
        %537 = vmatprep.mubr.f32.mxu0 %v314
        %538 = vmatmul.mubr.f32.gmra.mxu0 %v313
        %v539 = vpop.f32.mrf.mxu0
        %v540 = vadd.f32 %v376, %v539
        %v541 = vpop.f32.mrf.mxu0
        %542 = vmatprep.mubr.f32.mxu0 %v316
        %543 = vmatmul.mubr.f32.gmra.mxu0 %v315
        %v544 = vpop.f32.mrf.mxu0
        %v545 = vadd.f32 %v376, %v544
        %v546 = vpop.f32.mrf.mxu0
        %547 = vmatprep.mubr.f32.mxu0 %v318
        %548 = vmatmul.mubr.f32.gmra.mxu0 %v317
        %v549 = vpop.f32.mrf.mxu0
        %v550 = vadd.f32 %v376, %v549
        %v551 = vpop.f32.mrf.mxu0
        %552 = vmatprep.mubr.f32.mxu0 %v320
        %553 = vmatmul.mubr.f32.gmra.mxu0 %v319
        %v554 = vpop.f32.mrf.mxu0
        %v555 = vadd.f32 %v376, %v554
        %v556 = vpop.f32.mrf.mxu0
        %557 = vmatprep.mubr.f32.mxu0 %v322
        %558 = vmatmul.mubr.f32.gmra.mxu0 %v321
        %v559 = vpop.f32.mrf.mxu0
        %v560 = vadd.f32 %v376, %v559
        %v561 = vpop.f32.mrf.mxu0
        %562 = vmatprep.mubr.f32.mxu0 %v324
        %563 = vmatmul.mubr.f32.gmra.mxu0 %v323
        %v564 = vpop.f32.mrf.mxu0
        %v565 = vadd.f32 %v376, %v564
        %v566 = vpop.f32.mrf.mxu0
        %567 = vmatprep.mubr.f32.mxu0 %v326
        %568 = vmatmul.mubr.f32.gmra.mxu0 %v325
        %v569 = vpop.f32.mrf.mxu0
        %v570 = vadd.f32 %v376, %v569
        %v571 = vpop.f32.mrf.mxu0
        %572 = vmatprep.mubr.f32.mxu0 %v328
        %573 = vmatmul.mubr.f32.gmra.mxu0 %v327
        %v574 = vpop.f32.mrf.mxu0
        %v575 = vadd.f32 %v376, %v574
        %v576 = vpop.f32.mrf.mxu0
        %577 = vmatprep.mubr.f32.mxu0 %v330
        %578 = vmatmul.mubr.f32.gmra.mxu0 %v329
        %v579 = vpop.f32.mrf.mxu0
        %v580 = vadd.f32 %v376, %v579
        %v581 = vpop.f32.mrf.mxu0
        %582 = vmatprep.mubr.f32.mxu0 %v332
        %583 = vmatmul.mubr.f32.gmra.mxu0 %v331
        %v584 = vpop.f32.mrf.mxu0
        %v585 = vadd.f32 %v376, %v584
        %v586 = vpop.f32.mrf.mxu0
        %587 = vmatprep.mubr.f32.mxu0 %v334
        %588 = vmatmul.mubr.f32.gmra.mxu0 %v333
        %v589 = vpop.f32.mrf.mxu0
        %v590 = vadd.f32 %v376, %v589
        %v591 = vpop.f32.mrf.mxu0
        %592 = vmatprep.mubr.f32.mxu0 %v336
        %593 = vmatmul.mubr.f32.gmra.mxu0 %v335
        %v594 = vpop.f32.mrf.mxu0
        %v595 = vadd.f32 %v376, %v594
        %v596 = vpop.f32.mrf.mxu0
        %597 = vmatprep.mubr.f32.mxu0 %v338
        %598 = vmatmul.mubr.f32.gmra.mxu0 %v337
        %v599 = vpop.f32.mrf.mxu0
        %v600 = vadd.f32 %v376, %v599
        %v601 = vpop.f32.mrf.mxu0
        %602 = vdwg.mxu0
        %v603 = vmax.f32 %v445, 0.0
        %v604 = vmax.f32 %v450, 0.0
        %v605 = vmax.f32 %v455, 0.0
        %v606 = vmax.f32 %v460, 0.0
        %v607 = vmax.f32 %v465, 0.0
        %v608 = vmax.f32 %v470, 0.0
        %v609 = vmax.f32 %v475, 0.0
        %v610 = vmax.f32 %v480, 0.0
        %v611 = vmax.f32 %v485, 0.0
        %v612 = vmax.f32 %v490, 0.0
        %v613 = vmax.f32 %v495, 0.0
        %v614 = vmax.f32 %v500, 0.0
        %v615 = vmax.f32 %v505, 0.0
        %v616 = vmax.f32 %v510, 0.0
        %v617 = vmax.f32 %v515, 0.0
        %v618 = vmax.f32 %v520, 0.0
        %v619 = vmax.f32 %v525, 0.0
        %v620 = vmax.f32 %v530, 0.0
        %v621 = vmax.f32 %v535, 0.0
        %v622 = vmax.f32 %v540, 0.0
        %v623 = vmax.f32 %v545, 0.0
        %v624 = vmax.f32 %v550, 0.0
        %v625 = vmax.f32 %v555, 0.0
        %v626 = vmax.f32 %v560, 0.0
        %v627 = vmax.f32 %v565, 0.0
        %v628 = vmax.f32 %v570, 0.0
        %v629 = vmax.f32 %v575, 0.0
        %v630 = vmax.f32 %v580, 0.0
        %v631 = vmax.f32 %v585, 0.0
        %v632 = vmax.f32 %v590, 0.0
        %v633 = vmax.f32 %v595, 0.0
        %v634 = vmax.f32 %v600, 0.0
        %v635 = vld [vmem:[#allocation7] sm:$0xff]
        %v636 = vld [vmem:[#allocation7 + $0x8] sm:$0xff]
        %v637 = vld [vmem:[#allocation7 + $0x10] sm:$0xff]
        %v638 = vld [vmem:[#allocation7 + $0x18] sm:$0xff]
        %v639 = vld [vmem:[#allocation7 + $0x20] sm:$0xff]
        %v640 = vld [vmem:[#allocation7 + $0x28] sm:$0xff]
        %v641 = vld [vmem:[#allocation7 + $0x30] sm:$0xff]
        %v642 = vld [vmem:[#allocation7 + $0x38] sm:$0xff]
        %v643 = vld [vmem:[#allocation7 + $0x40] sm:$0xff]
        %v644 = vld [vmem:[#allocation7 + $0x48] sm:$0xff]
        %v645 = vld [vmem:[#allocation7 + $0x50] sm:$0xff]
        %v646 = vld [vmem:[#allocation7 + $0x58] sm:$0xff]
        %v647 = vld [vmem:[#allocation7 + $0x60] sm:$0xff]
        %v648 = vld [vmem:[#allocation7 + $0x68] sm:$0xff]
        %v649 = vld [vmem:[#allocation7 + $0x70] sm:$0xff]
        %v650 = vld [vmem:[#allocation7 + $0x78] sm:$0xff]
        %v651 = vld [vmem:[%s4] sm:$0x1]
        %v653 = vlaneseq
        %v654 = vshrl.u32 %v653, 7
        %v655 = vsub.s32 0, %v654
        %v656 = vrot.slane %v651, %v655
        %658 = vmatprep.subr.mxu0 0.0
        %659 = vmatpush1.msra.mxu0 %v650
        %660 = vmatprep.subr.mxu0 0.0
        %661 = vmatpush1.msra.mxu0 %v649
        %662 = vmatprep.subr.mxu0 0.0
        %663 = vmatpush1.msra.mxu0 %v648
        %664 = vmatprep.subr.mxu0 0.0
        %665 = vmatpush1.msra.mxu0 %v647
        %666 = vmatprep.subr.mxu0 0.0
        %667 = vmatpush1.msra.mxu0 %v646
        %668 = vmatprep.subr.mxu0 0.0
        %669 = vmatpush1.msra.mxu0 %v645
        %670 = vmatprep.subr.mxu0 0.0
        %671 = vmatpush1.msra.mxu0 %v644
        %672 = vmatprep.subr.mxu0 0.0
        %673 = vmatpush1.msra.mxu0 %v643
        %674 = vmatprep.subr.mxu0 0.0
        %675 = vmatpush1.msra.mxu0 %v642
        %676 = vmatprep.subr.mxu0 0.0
        %677 = vmatpush1.msra.mxu0 %v641
        %678 = vmatprep.subr.mxu0 0.0
        %679 = vmatpush1.msra.mxu0 %v640
        %680 = vmatprep.subr.mxu0 0.0
        %681 = vmatpush1.msra.mxu0 %v639
        %682 = vmatprep.subr.mxu0 0.0
        %683 = vmatpush1.msra.mxu0 %v638
        %684 = vmatprep.subr.mxu0 0.0
        %685 = vmatpush1.msra.mxu0 %v637
        %686 = vmatprep.subr.mxu0 0.0
        %687 = vmatpush1.msra.mxu0 %v636
        %688 = vmatprep.subr.mxu0 0.0
        %689 = vmatpush1.msra.mxu0 %v635
        %690 = vmatprep.subr.mxu0 0.0
        %691 = vmatpush2.msra.mxu0 0.0
        %692 = vmatprep.subr.mxu0 0.0
        %693 = vmatpush2.msra.mxu0 0.0
        %694 = vmatprep.subr.mxu0 0.0
        %695 = vmatpush2.msra.mxu0 0.0
        %696 = vmatprep.subr.mxu0 0.0
        %697 = vmatpush2.msra.mxu0 0.0
        %698 = vmatprep.subr.mxu0 0.0
        %699 = vmatpush2.msra.mxu0 0.0
        %700 = vmatprep.subr.mxu0 0.0
        %701 = vmatpush2.msra.mxu0 0.0
        %702 = vmatprep.subr.mxu0 0.0
        %703 = vmatpush2.msra.mxu0 0.0
        %704 = vmatprep.subr.mxu0 0.0
        %705 = vmatpush2.msra.mxu0 0.0
        %706 = vmatprep.subr.mxu0 0.0
        %707 = vmatpush2.msra.mxu0 0.0
        %708 = vmatprep.subr.mxu0 0.0
        %709 = vmatpush2.msra.mxu0 0.0
        %710 = vmatprep.subr.mxu0 0.0
        %711 = vmatpush2.msra.mxu0 0.0
        %712 = vmatprep.subr.mxu0 0.0
        %713 = vmatpush2.msra.mxu0 0.0
        %714 = vmatprep.subr.mxu0 0.0
        %715 = vmatpush2.msra.mxu0 0.0
        %716 = vmatprep.subr.mxu0 0.0
        %717 = vmatpush2.msra.mxu0 0.0
        %718 = vmatprep.subr.mxu0 0.0
        %719 = vmatpush2.msra.mxu0 0.0
        %720 = vmatprep.subr.mxu0 0.0
        %721 = vmatpush2.msra.mxu0 0.0
        %722 = vmatprep.mubr.f32.mxu0 0.0
        %723 = vmatmul.mubr.f32.gmra.mxu0 %v603
        %v724 = vpop.f32.mrf.mxu0
        %v725 = vadd.f32 %v656, %v724
        %v726 = vpop.f32.mrf.mxu0
        %727 = vmatprep.mubr.f32.mxu0 0.0
        %728 = vmatmul.mubr.f32.gmra.mxu0 %v604
        %v729 = vpop.f32.mrf.mxu0
        %v730 = vadd.f32 %v656, %v729
        %v731 = vpop.f32.mrf.mxu0
        %732 = vmatprep.mubr.f32.mxu0 0.0
        %733 = vmatmul.mubr.f32.gmra.mxu0 %v605
        %v734 = vpop.f32.mrf.mxu0
        %v735 = vadd.f32 %v656, %v734
        %v736 = vpop.f32.mrf.mxu0
        %737 = vmatprep.mubr.f32.mxu0 0.0
        %738 = vmatmul.mubr.f32.gmra.mxu0 %v606
        %v739 = vpop.f32.mrf.mxu0
        %v740 = vadd.f32 %v656, %v739
        %v741 = vpop.f32.mrf.mxu0
        %742 = vmatprep.mubr.f32.mxu0 0.0
        %743 = vmatmul.mubr.f32.gmra.mxu0 %v607
        %v744 = vpop.f32.mrf.mxu0
        %v745 = vadd.f32 %v656, %v744
        %v746 = vpop.f32.mrf.mxu0
        %747 = vmatprep.mubr.f32.mxu0 0.0
        %748 = vmatmul.mubr.f32.gmra.mxu0 %v608
        %v749 = vpop.f32.mrf.mxu0
        %v750 = vadd.f32 %v656, %v749
        %v751 = vpop.f32.mrf.mxu0
        %752 = vmatprep.mubr.f32.mxu0 0.0
        %753 = vmatmul.mubr.f32.gmra.mxu0 %v609
        %v754 = vpop.f32.mrf.mxu0
        %v755 = vadd.f32 %v656, %v754
        %v756 = vpop.f32.mrf.mxu0
        %757 = vmatprep.mubr.f32.mxu0 0.0
        %758 = vmatmul.mubr.f32.gmra.mxu0 %v610
        %v759 = vpop.f32.mrf.mxu0
        %v760 = vadd.f32 %v656, %v759
        %v761 = vpop.f32.mrf.mxu0
        %762 = vmatprep.mubr.f32.mxu0 0.0
        %763 = vmatmul.mubr.f32.gmra.mxu0 %v611
        %v764 = vpop.f32.mrf.mxu0
        %v765 = vadd.f32 %v656, %v764
        %v766 = vpop.f32.mrf.mxu0
        %767 = vmatprep.mubr.f32.mxu0 0.0
        %768 = vmatmul.mubr.f32.gmra.mxu0 %v612
        %v769 = vpop.f32.mrf.mxu0
        %v770 = vadd.f32 %v656, %v769
        %v771 = vpop.f32.mrf.mxu0
        %772 = vmatprep.mubr.f32.mxu0 0.0
        %773 = vmatmul.mubr.f32.gmra.mxu0 %v613
        %v774 = vpop.f32.mrf.mxu0
        %v775 = vadd.f32 %v656, %v774
        %v776 = vpop.f32.mrf.mxu0
        %777 = vmatprep.mubr.f32.mxu0 0.0
        %778 = vmatmul.mubr.f32.gmra.mxu0 %v614
        %v779 = vpop.f32.mrf.mxu0
        %v780 = vadd.f32 %v656, %v779
        %v781 = vpop.f32.mrf.mxu0
        %782 = vmatprep.mubr.f32.mxu0 0.0
        %783 = vmatmul.mubr.f32.gmra.mxu0 %v615
        %v784 = vpop.f32.mrf.mxu0
        %v785 = vadd.f32 %v656, %v784
        %v786 = vpop.f32.mrf.mxu0
        %787 = vmatprep.mubr.f32.mxu0 0.0
        %788 = vmatmul.mubr.f32.gmra.mxu0 %v616
        %v789 = vpop.f32.mrf.mxu0
        %v790 = vadd.f32 %v656, %v789
        %v791 = vpop.f32.mrf.mxu0
        %792 = vmatprep.mubr.f32.mxu0 0.0
        %793 = vmatmul.mubr.f32.gmra.mxu0 %v617
        %v794 = vpop.f32.mrf.mxu0
        %v795 = vadd.f32 %v656, %v794
        %v796 = vpop.f32.mrf.mxu0
        %797 = vmatprep.mubr.f32.mxu0 0.0
        %798 = vmatmul.mubr.f32.gmra.mxu0 %v618
        %v799 = vpop.f32.mrf.mxu0
        %v800 = vadd.f32 %v656, %v799
        %v801 = vpop.f32.mrf.mxu0
        %802 = vmatprep.mubr.f32.mxu0 0.0
        %803 = vmatmul.mubr.f32.gmra.mxu0 %v619
        %v804 = vpop.f32.mrf.mxu0
        %v805 = vadd.f32 %v656, %v804
        %v806 = vpop.f32.mrf.mxu0
        %807 = vmatprep.mubr.f32.mxu0 0.0
        %808 = vmatmul.mubr.f32.gmra.mxu0 %v620
        %v809 = vpop.f32.mrf.mxu0
        %v810 = vadd.f32 %v656, %v809
        %v811 = vpop.f32.mrf.mxu0
        %812 = vmatprep.mubr.f32.mxu0 0.0
        %813 = vmatmul.mubr.f32.gmra.mxu0 %v621
        %v814 = vpop.f32.mrf.mxu0
        %v815 = vadd.f32 %v656, %v814
        %v816 = vpop.f32.mrf.mxu0
        %817 = vmatprep.mubr.f32.mxu0 0.0
        %818 = vmatmul.mubr.f32.gmra.mxu0 %v622
        %v819 = vpop.f32.mrf.mxu0
        %v820 = vadd.f32 %v656, %v819
        %v821 = vpop.f32.mrf.mxu0
        %822 = vmatprep.mubr.f32.mxu0 0.0
        %823 = vmatmul.mubr.f32.gmra.mxu0 %v623
        %v824 = vpop.f32.mrf.mxu0
        %v825 = vadd.f32 %v656, %v824
        %v826 = vpop.f32.mrf.mxu0
        %827 = vmatprep.mubr.f32.mxu0 0.0
        %828 = vmatmul.mubr.f32.gmra.mxu0 %v624
        %v829 = vpop.f32.mrf.mxu0
        %v830 = vadd.f32 %v656, %v829
        %v831 = vpop.f32.mrf.mxu0
        %832 = vmatprep.mubr.f32.mxu0 0.0
        %833 = vmatmul.mubr.f32.gmra.mxu0 %v625
        %v834 = vpop.f32.mrf.mxu0
        %v835 = vadd.f32 %v656, %v834
        %v836 = vpop.f32.mrf.mxu0
        %837 = vmatprep.mubr.f32.mxu0 0.0
        %838 = vmatmul.mubr.f32.gmra.mxu0 %v626
        %v839 = vpop.f32.mrf.mxu0
        %v840 = vadd.f32 %v656, %v839
        %v841 = vpop.f32.mrf.mxu0
        %842 = vmatprep.mubr.f32.mxu0 0.0
        %843 = vmatmul.mubr.f32.gmra.mxu0 %v627
        %v844 = vpop.f32.mrf.mxu0
        %v845 = vadd.f32 %v656, %v844
        %v846 = vpop.f32.mrf.mxu0
        %847 = vmatprep.mubr.f32.mxu0 0.0
        %848 = vmatmul.mubr.f32.gmra.mxu0 %v628
        %v849 = vpop.f32.mrf.mxu0
        %v850 = vadd.f32 %v656, %v849
        %v851 = vpop.f32.mrf.mxu0
        %852 = vmatprep.mubr.f32.mxu0 0.0
        %853 = vmatmul.mubr.f32.gmra.mxu0 %v629
        %v854 = vpop.f32.mrf.mxu0
        %v855 = vadd.f32 %v656, %v854
        %v856 = vpop.f32.mrf.mxu0
        %857 = vmatprep.mubr.f32.mxu0 0.0
        %858 = vmatmul.mubr.f32.gmra.mxu0 %v630
        %v859 = vpop.f32.mrf.mxu0
        %v860 = vadd.f32 %v656, %v859
        %v861 = vpop.f32.mrf.mxu0
        %862 = vmatprep.mubr.f32.mxu0 0.0
        %863 = vmatmul.mubr.f32.gmra.mxu0 %v631
        %v864 = vpop.f32.mrf.mxu0
        %v865 = vadd.f32 %v656, %v864
        %v866 = vpop.f32.mrf.mxu0
        %867 = vmatprep.mubr.f32.mxu0 0.0
        %868 = vmatmul.mubr.f32.gmra.mxu0 %v632
        %v869 = vpop.f32.mrf.mxu0
        %v870 = vadd.f32 %v656, %v869
        %v871 = vpop.f32.mrf.mxu0
        %872 = vmatprep.mubr.f32.mxu0 0.0
        %873 = vmatmul.mubr.f32.gmra.mxu0 %v633
        %v874 = vpop.f32.mrf.mxu0
        %v875 = vadd.f32 %v656, %v874
        %v876 = vpop.f32.mrf.mxu0
        %877 = vmatprep.mubr.f32.mxu0 0.0
        %878 = vmatmul.mubr.f32.gmra.mxu0 %v634
        %v879 = vpop.f32.mrf.mxu0
        %v880 = vadd.f32 %v656, %v879
        %v881 = vpop.f32.mrf.mxu0
        %882 = vdwg.mxu0
        %883 = vst [vmem:[%s272] sm:$0xff] %v725
        %884 = vst [vmem:[%s272 + $0x8] sm:$0xff] %v730
        %885 = vst [vmem:[%s272 + $0x10] sm:$0xff] %v735
        %886 = vst [vmem:[%s272 + $0x18] sm:$0xff] %v740
        %887 = vst [vmem:[%s272 + $0x20] sm:$0xff] %v745
        %888 = vst [vmem:[%s272 + $0x28] sm:$0xff] %v750
        %889 = vst [vmem:[%s272 + $0x30] sm:$0xff] %v755
        %890 = vst [vmem:[%s272 + $0x38] sm:$0xff] %v760
        %891 = vst [vmem:[%s272 + $0x40] sm:$0xff] %v765
        %892 = vst [vmem:[%s272 + $0x48] sm:$0xff] %v770
        %893 = vst [vmem:[%s272 + $0x50] sm:$0xff] %v775
        %894 = vst [vmem:[%s272 + $0x58] sm:$0xff] %v780
        %895 = vst [vmem:[%s272 + $0x60] sm:$0xff] %v785
        %896 = vst [vmem:[%s272 + $0x68] sm:$0xff] %v790
        %897 = vst [vmem:[%s272 + $0x70] sm:$0xff] %v795
        %898 = vst [vmem:[%s272 + $0x78] sm:$0xff] %v800
        %899 = vst [vmem:[%s272 + $0x80] sm:$0xff] %v805
        %900 = vst [vmem:[%s272 + $0x88] sm:$0xff] %v810
        %901 = vst [vmem:[%s272 + $0x90] sm:$0xff] %v815
        %902 = vst [vmem:[%s272 + $0x98] sm:$0xff] %v820
        %903 = vst [vmem:[%s272 + $0xa0] sm:$0xff] %v825
        %904 = vst [vmem:[%s272 + $0xa8] sm:$0xff] %v830
        %905 = vst [vmem:[%s272 + $0xb0] sm:$0xff] %v835
        %906 = vst [vmem:[%s272 + $0xb8] sm:$0xff] %v840
        %907 = vst [vmem:[%s272 + $0xc0] sm:$0xff] %v845
        %908 = vst [vmem:[%s272 + $0xc8] sm:$0xff] %v850
        %909 = vst [vmem:[%s272 + $0xd0] sm:$0xff] %v855
        %910 = vst [vmem:[%s272 + $0xd8] sm:$0xff] %v860
        %911 = vst [vmem:[%s272 + $0xe0] sm:$0xff] %v865
        %912 = vst [vmem:[%s272 + $0xe8] sm:$0xff] %v870
        %913 = vst [vmem:[%s272 + $0xf0] sm:$0xff] %v875
        %914 = vst [vmem:[%s272 + $0xf8] sm:$0xff] %v880
        %s915 = sand.u32 %s141, 1
        %s916 = scalar_lea.sflag [#allocation4], %s915
        %s917 = sand.u32 %s141, 1
        %s918 = smul.addr %s917, 256
        %s919 = scalar_lea.vmem [#allocation8], %s918
        // Predicated region
        $region53: #{tpu_custom_call.1} parent=39 // pred_check
          %p920 = pneg %p151
        $region54: #{tpu_custom_call.1} parent=39 // pred_check_branch
          %922 = sbr.rel (%p920) target = $region56
        $region55: #{tpu_custom_call.1} parent=39 // pred_region
          %s923 = smul.u32 32, %s23
          %s925 = ssub.s32 4096, 4096
          %926 = vsyncadd %s916, %s925
          %s927 = smul.addr %s923, 128
          %s928 = scalar_lea.hbm %s5, %s927
          %s929 = sshll.u32 %s919, 4
          %s930 = int_to_ptr.vmem [resolvable:$true] %s929
          %935 = dma.vmem_to_hbm [thread:$0]  %s930, 4096, %s928, %s916, 128, 128, 8
        $region56: #{tpu_custom_call.1} parent=39 // pred_fallthru
          _
      $region40: #{tpu_custom_call.1} parent=5 // pred_fallthru
        _
      %p936 = scmp.le.s32.totalorder 2, %s18
      // Predicated region
      $region57: #{tpu_custom_call.1} parent=5 // pred_check
        %p937 = pneg %p936
      $region58: #{tpu_custom_call.1} parent=5 // pred_check_branch
        %939 = sbr.rel (%p937) target = $region60
      $region59: #{tpu_custom_call.1} parent=5 // pred_region
        %s940 = ssub.s32 %s18, 2
        // Predicated region
        $region61: #{tpu_custom_call.1} parent=59 // pred_check
          %p941 = pneg %p157
        $region62: #{tpu_custom_call.1} parent=59 // pred_check_branch
          %943 = sbr.rel (%p941) target = $region64
        $region63: #{tpu_custom_call.1} parent=59 // pred_region
          %s944 = sand.u32 %s142, 1
          %s945 = scalar_lea.sflag [#allocation4], %s944
          %s946 = sand.u32 %s142, 1
          %s947 = smul.addr %s946, 256
          %s948 = scalar_lea.vmem [#allocation8], %s947
          %949 = dma.done %s945, 4096
        $region64: #{tpu_custom_call.1} parent=59 // pred_fallthru
          _
      $region60: #{tpu_custom_call.1} parent=5 // pred_fallthru
        _
    $region6: #{tpu_custom_call.1} parent=1 // loop_footer
      %s22 = sadd.s32 1, %s18
    $region7: #{tpu_custom_call.1} parent=1 // loop_footer_branch
      %17 = sbr.rel target = $region3
    $region8: #{tpu_custom_call.1} parent=1 // loop_exit
      _
    %950 = vsyncpa [#allocation3], 1
    %s951 = scalar_lea.sflag [#allocation3], 1
    %952 = vsyncpa %s951, 1
    %953 = vsyncpa [#allocation6], 1
    %954 = vsyncpa [#allocation4], 1
    %s955 = scalar_lea.sflag [#allocation4], 1
    %956 = vsyncpa %s955, 1

</llo_original>
